<compile_context>
chip_gen: v5e
topology: v5e:2x2
jax: 0.10.0
libtpu: 0.0.40
codegen_flags: <defaults>
</compile_context>

<pallas_src>
import functools

import jax
import jax.numpy as jnp
from jax.experimental import pallas as pl
from jax.experimental.pallas import tpu as pltpu


def _linear_encoder_kernel(feat_ref, w_ref, b_ref, out_ref, *, precision):
    # feat_ref: (tR, Kg)   w_ref: (Kg, Ng)   b_ref: (1, Ng)   out_ref: (tR, Ng)
    # Single MXU matmul; the 1/L mean (and optional row-grouping block-diagonal
    # structure) is pre-folded into w_ref by the wrapper.
    acc = jnp.dot(feat_ref[...], w_ref[...],
                  preferred_element_type=jnp.float32, precision=precision)
    out_ref[...] = (acc + b_ref[...]).astype(out_ref.dtype)


def _cdiv(a, b):
    return -(-a // b)


def _ceil_to(x, m):
    return _cdiv(x, m) * m


def _vmem_capacity_bytes():
    try:
        return int(pltpu.get_tpu_info().vmem_capacity_bytes)
    except Exception:
        return 0  # unknown -> use the conservative branch


def _gen_config():
    """Generation-aware tiling knobs keyed off physical VMEM size."""
    vmem = _vmem_capacity_bytes()
    if vmem >= 100 * 1024 * 1024:
        # v5e / v6e class: 128 MiB VMEM, 1 TensorCore -> grid is a serial loop.
        return dict(vmem_limit=64 << 20, feat_budget=16 << 20,
                    want_split=False, auto_group=False)
    # v7x class (64 MiB VMEM, 2 TensorCores) or unknown chip: stay clear of OOM.
    return dict(vmem_limit=40 << 20, feat_budget=10 << 20,
                want_split=True, auto_group=True)


def _choose_block_rows(n_rows, row_bytes, budget_bytes, want_split):
    """Row tile of the 2-D feat view: as big as the VMEM budget allows, rounded
    to a multiple of 8 (128 when large) for (8,128) legality, full-dim for small
    problems, and split into >= 2 balanced blocks on 2-TensorCore chips."""
    rows = max(8, (budget_bytes // max(1, row_bytes)) // 8 * 8)
    if rows >= 128:
        rows = (rows // 128) * 128
    if n_rows <= rows:
        if want_split and n_rows >= 64:
            half = _ceil_to(_cdiv(n_rows, 2), 8)  # sublane-legal partial block
            if half < n_rows:
                return half
        return n_rows                              # full dim: always layout-legal
    if want_split:
        steps = _cdiv(n_rows, rows)
        if steps % 2 == 1:                         # balance the two TensorCores
            steps += 1
            rows = max(8, _ceil_to(_cdiv(n_rows, steps), 8))
    return rows


def fold_linear_encoder_params(weight, bias, L, group=1):
    """Precompute the folded (mean-absorbing, optionally row-grouped) params.
    Hoist this out of the per-call path when weights are reused across calls."""
    d_out, d_in = weight.shape
    w_fold = (jnp.tile(weight.T, (L, 1)) * (1.0 / L)).astype(weight.dtype)  # (L*d_in, d_out)
    b_fold = bias.astype(jnp.float32).reshape(1, d_out)
    if group > 1:
        # Block-diagonal replication: a grouped feat row [x_0 | ... | x_{g-1}]
        # times kron(I_g, W_fold) gives [x_0 @ W_fold | ... | x_{g-1} @ W_fold].
        w_fold = jnp.kron(jnp.eye(group, dtype=w_fold.dtype), w_fold)
        b_fold = jnp.tile(b_fold, (1, group))
    return w_fold, b_fold


def linear_encoder(feat, weight, bias, *, group=None):
    """feat: (E, L, d_in); weight: (d_out, d_in) [torch layout]; bias: (d_out,)."""
    E, L, d_in = feat.shape
    d_out, w_in = weight.shape
    assert w_in == d_in
    K = L * d_in
    cfg = _gen_config()

    # Row-grouping factor so the output slab is >= 128 lanes wide (lane-dense
    # unmasked stores).  Auto-enabled only on 2-TC / small-VMEM (v7x-class).
    if group is None:
        g = 128 // d_out if (cfg["auto_group"] and 0 < d_out < 128
                             and 128 % d_out == 0) else 1
    else:
        g = max(1, int(group))
    if g > 1 and E % g != 0:
        g = 1  # keep the (E, L*d_in) -> (E/g, g*K) reshape a free HBM view

    n_rows, Kg, Ng = E // g, g * K, g * d_out
    feat2 = feat.reshape(n_rows, Kg)                        # free row-major view
    w_big, b_big = fold_linear_encoder_params(weight, bias, L, g)

    itemsize = jnp.dtype(feat.dtype).itemsize
    block_rows = _choose_block_rows(n_rows, Kg * itemsize,
                                    cfg["feat_budget"], cfg["want_split"])
    grid = (_cdiv(n_rows, block_rows),)

    # Review note: default TPU f32 dot is a single bf16 pass; use HIGHEST for
    # f32 inputs (kernel is HBM-bound, so the extra MXU passes are hidden).
    precision = (jax.lax.Precision.HIGHEST
                 if feat.dtype == jnp.float32 and w_big.dtype == jnp.float32
                 else None)

    out = pl.pallas_call(
        functools.partial(_linear_encoder_kernel, precision=precision),
        out_shape=jax.ShapeDtypeStruct((n_rows, Ng), feat.dtype),
        grid_spec=pltpu.PrefetchScalarGridSpec(
            num_scalar_prefetch=0,
            grid=grid,
            in_specs=[
                pl.BlockSpec((block_rows, Kg), lambda i: (i, 0)),
                pl.BlockSpec((Kg, Ng), lambda i: (0, 0)),   # grid-invariant
                pl.BlockSpec((1, Ng), lambda i: (0, 0)),    # grid-invariant
            ],
            out_specs=pl.BlockSpec((block_rows, Ng), lambda i: (i, 0)),
        ),
        compiler_params=pltpu.CompilerParams(
            dimension_semantics=("parallel",),
            vmem_limit_bytes=cfg["vmem_limit"],
        ),
    )(feat2, w_big, b_big)
    return out.reshape(E, d_out)                            # free row-major view


if __name__ == "__main__":
    # Small shapes consistent with the module: E metapath instances, L vertices
    # per instance, d_in input feature dim, d_out output dim.
    E, L, d_in, d_out = 16, 8, 32, 32

    key = jax.random.PRNGKey(0)
    k_feat, k_w, k_b = jax.random.split(key, 3)

    feat = jax.random.normal(k_feat, (E, L, d_in), dtype=jnp.float32)
    # Deterministic parameter init (nn.Linear-style uniform(-1/sqrt(in), 1/sqrt(in)))
    bound = 1.0 / (d_in ** 0.5)
    weight = jax.random.uniform(k_w, (d_out, d_in), jnp.float32, -bound, bound)
    bias = jax.random.uniform(k_b, (d_out,), jnp.float32, -bound, bound)

    enc_auto = jax.jit(linear_encoder)
    out = jax.block_until_ready(enc_auto(feat, weight, bias))
    ref = feat.mean(axis=1) @ weight.T + bias
    assert out.shape == (E, d_out)
    assert jnp.allclose(out, ref, atol=1e-4, rtol=1e-4)

    # Ragged E: exercises the partial last block and (on 2-TC chips) the
    # balanced grid split.  Also force both the grouped (lane-dense, v7x-style)
    # and ungrouped code paths so both are exercised regardless of chip.
    E2 = 300
    feat_big = jax.random.normal(jax.random.PRNGKey(1), (E2, L, d_in), dtype=jnp.float32)
    ref2 = feat_big.mean(axis=1) @ weight.T + bias
    for grp in (None, 1, 4):
        enc = jax.jit(functools.partial(linear_encoder, group=grp))
        out2 = jax.block_until_ready(enc(feat_big, weight, bias))
        assert out2.shape == (E2, d_out)
        assert jnp.allclose(out2, ref2, atol=1e-4, rtol=1e-4)

    print("KERNEL_OK")
</pallas_src>

<mosaic_0001>
module attributes {stable_mosaic.version = 11 : i64} {
  func.func @_linear_encoder_kernel(%arg0: i32, %arg1: memref<4x1024xf32, #tpu.memory_space<vmem>>, %arg2: memref<1024x128xf32, #tpu.memory_space<vmem>>, %arg3: memref<1x128xf32, #tpu.memory_space<vmem>>, %arg4: memref<4x128xf32, #tpu.memory_space<vmem>>) attributes {dimension_semantics = [#tpu.dimension_semantics<parallel>], iteration_bounds = array<i64: 1>, scalar_prefetch = 0 : i64, scratch_operands = 0 : i64, tpu.core_type = #tpu.core_type<tc>, window_params = [{transform_indices = @transform_0, window_bounds = array<i64: 4, 1024>}, {pipeline_mode = #tpu.pipeline_mode<synchronous>, transform_indices = @transform_1, window_bounds = array<i64: 1024, 128>}, {pipeline_mode = #tpu.pipeline_mode<synchronous>, transform_indices = @transform_2, window_bounds = array<i64: 1, 128>}, {transform_indices = @transform_3, window_bounds = array<i64: 4, 128>}]} {
    %c0 = arith.constant 0 : index
    %c0_0 = arith.constant 0 : index
    %0 = vector.load %arg1[%c0, %c0_0] : memref<4x1024xf32, #tpu.memory_space<vmem>>, vector<4x1024xf32>
    %c0_1 = arith.constant 0 : index
    %c0_2 = arith.constant 0 : index
    %1 = vector.load %arg2[%c0_1, %c0_2] : memref<1024x128xf32, #tpu.memory_space<vmem>>, vector<1024x128xf32>
    %cst = arith.constant dense<0.000000e+00> : vector<4x128xf32>
    %2 = tpu.matmul %0, %1, %cst {dimension_numbers = #tpu.dot_dimension_numbers<[1], [0], [0], [1], [0, 0, 1, 1], [], []>, precision = #tpu.contract_precision<fp32>} : vector<4x1024xf32>, vector<1024x128xf32>, vector<4x128xf32> -> vector<4x128xf32>
    %c0_3 = arith.constant 0 : index
    %c0_4 = arith.constant 0 : index
    %3 = vector.load %arg3[%c0_3, %c0_4] : memref<1x128xf32, #tpu.memory_space<vmem>>, vector<1x128xf32>
    %4 = vector.broadcast %3 : vector<1x128xf32> to vector<4x128xf32>
    %5 = arith.addf %2, %4 : vector<4x128xf32>
    %c0_5 = arith.constant 0 : index
    %c0_6 = arith.constant 0 : index
    %6 = vector.load %arg4[%c0_5, %c0_6] : memref<4x128xf32, #tpu.memory_space<vmem>>, vector<4x128xf32>
    tpu.vector_store %arg4[%c0_5, %c0_6], %5 {strides = array<i32>} : memref<4x128xf32, #tpu.memory_space<vmem>>, vector<4x128xf32>,
    return
  }
  func.func @transform_0(%arg0: i32) -> (i32, i32) {
    %c0_i32 = arith.constant 0 : i32
    %c0_i32_0 = arith.constant 0 : i32
    return %arg0, %c0_i32 : i32, i32
  }
  func.func @transform_1(%arg0: i32) -> (i32, i32) {
    %c0_i32 = arith.constant 0 : i32
    %c0_i32_0 = arith.constant 0 : i32
    %c0_i32_1 = arith.constant 0 : i32
    return %c0_i32, %c0_i32_0 : i32, i32
  }
  func.func @transform_2(%arg0: i32) -> (i32, i32) {
    %c0_i32 = arith.constant 0 : i32
    %c0_i32_0 = arith.constant 0 : i32
    %c0_i32_1 = arith.constant 0 : i32
    return %c0_i32, %c0_i32_0 : i32, i32
  }
  func.func @transform_3(%arg0: i32) -> (i32, i32) {
    %c0_i32 = arith.constant 0 : i32
    %c0_i32_0 = arith.constant 0 : i32
    return %arg0, %c0_i32 : i32, i32
  }
}

</mosaic_0001>

<llo_original>
// kernel: linear_encoder.1
$region0: #{linear_encoder.1}
  #allocation0 [shape = 'u32[]', space=smem, size = 0x4, offset = 0x4, fixed_abs, tag = 'smem constant byte address 0x4 - core index']
  #allocation1 [shape = 'u32[72,128]{1,0:T(1,128)}', space=vmem, size = 0x9000, scoped, tag = 'internal scratch']
  %s0 = inlined_call_operand.vmem [shape: f32[4,1024], index: 0, kind: input, shape index: {}]
  %s1 = inlined_call_operand.vmem [shape: f32[1024,128], index: 1, kind: input, shape index: {}]
  %s2 = inlined_call_operand.vmem [shape: f32[1,128], index: 2, kind: input, shape index: {}]
  %s3 = inlined_call_operand.vmem [shape: f32[4,128], index: 3, kind: output, shape index: {}]
  %s4 = sld [smem:[#allocation0]]
  $region22: #{linear_encoder.1} parent=0
    _
  %s6 = ssub.s32 1, %s4
  %s7 = scalar_select 0, %s6, %s4
  // Predicated region
  $region2: #{linear_encoder.1} parent=0 // pred_check
    _
  $region3: #{linear_encoder.1} parent=0 // pred_check_branch
    %9 = sbr.rel (0) target = $region5
  $region4: #{linear_encoder.1} parent=0 // pred_region
    _
  $region5: #{linear_encoder.1} parent=0 // pred_fallthru
    _
  // Predicated region
  $region6: #{linear_encoder.1} parent=0 // pred_check
    _
  $region7: #{linear_encoder.1} parent=0 // pred_check_branch
    %11 = sbr.rel (0) target = $region9
  $region8: #{linear_encoder.1} parent=0 // pred_region
    _
  $region9: #{linear_encoder.1} parent=0 // pred_fallthru
    _
  // Predicated region
  $region10: #{linear_encoder.1} parent=0 // pred_check
    _
  $region11: #{linear_encoder.1} parent=0 // pred_check_branch
    %13 = sbr.rel (0) target = $region13
  $region12: #{linear_encoder.1} parent=0 // pred_region
    _
  $region13: #{linear_encoder.1} parent=0 // pred_fallthru
    _
  %v14 = vld [vmem:[%s0] sm:$0xff]
  %v15 = vld [vmem:[%s0 + $0x8] sm:$0xff]
  %v16 = vld [vmem:[%s0 + $0x10] sm:$0xff]
  %v17 = vld [vmem:[%s0 + $0x18] sm:$0xff]
  %v18 = vld [vmem:[%s1] sm:$0xff]
  %v19 = vld [vmem:[%s1 + $0x8] sm:$0xff]
  %v20 = vld [vmem:[%s1 + $0x10] sm:$0xff]
  %v21 = vld [vmem:[%s1 + $0x18] sm:$0xff]
  %v22 = vld [vmem:[%s1 + $0x20] sm:$0xff]
  %v23 = vld [vmem:[%s1 + $0x28] sm:$0xff]
  %v24 = vld [vmem:[%s1 + $0x30] sm:$0xff]
  %v25 = vld [vmem:[%s1 + $0x38] sm:$0xff]
  %v26 = vld [vmem:[%s1 + $0x40] sm:$0xff]
  %v27 = vld [vmem:[%s1 + $0x48] sm:$0xff]
  %v28 = vld [vmem:[%s1 + $0x50] sm:$0xff]
  %v29 = vld [vmem:[%s1 + $0x58] sm:$0xff]
  %v30 = vld [vmem:[%s1 + $0x60] sm:$0xff]
  %v31 = vld [vmem:[%s1 + $0x68] sm:$0xff]
  %v32 = vld [vmem:[%s1 + $0x70] sm:$0xff]
  %v33 = vld [vmem:[%s1 + $0x78] sm:$0xff]
  %v34 = vld [vmem:[%s1 + $0x80] sm:$0xff]
  %v35 = vld [vmem:[%s1 + $0x88] sm:$0xff]
  %v36 = vld [vmem:[%s1 + $0x90] sm:$0xff]
  %v37 = vld [vmem:[%s1 + $0x98] sm:$0xff]
  %v38 = vld [vmem:[%s1 + $0xa0] sm:$0xff]
  %v39 = vld [vmem:[%s1 + $0xa8] sm:$0xff]
  %v40 = vld [vmem:[%s1 + $0xb0] sm:$0xff]
  %v41 = vld [vmem:[%s1 + $0xb8] sm:$0xff]
  %v42 = vld [vmem:[%s1 + $0xc0] sm:$0xff]
  %v43 = vld [vmem:[%s1 + $0xc8] sm:$0xff]
  %v44 = vld [vmem:[%s1 + $0xd0] sm:$0xff]
  %v45 = vld [vmem:[%s1 + $0xd8] sm:$0xff]
  %v46 = vld [vmem:[%s1 + $0xe0] sm:$0xff]
  %v47 = vld [vmem:[%s1 + $0xe8] sm:$0xff]
  %v48 = vld [vmem:[%s1 + $0xf0] sm:$0xff]
  %v49 = vld [vmem:[%s1 + $0xf8] sm:$0xff]
  %v50 = vld [vmem:[%s1 + $0x100] sm:$0xff]
  %v51 = vld [vmem:[%s1 + $0x108] sm:$0xff]
  %v52 = vld [vmem:[%s1 + $0x110] sm:$0xff]
  %v53 = vld [vmem:[%s1 + $0x118] sm:$0xff]
  %v54 = vld [vmem:[%s1 + $0x120] sm:$0xff]
  %v55 = vld [vmem:[%s1 + $0x128] sm:$0xff]
  %v56 = vld [vmem:[%s1 + $0x130] sm:$0xff]
  %v57 = vld [vmem:[%s1 + $0x138] sm:$0xff]
  %v58 = vld [vmem:[%s1 + $0x140] sm:$0xff]
  %v59 = vld [vmem:[%s1 + $0x148] sm:$0xff]
  %v60 = vld [vmem:[%s1 + $0x150] sm:$0xff]
  %v61 = vld [vmem:[%s1 + $0x158] sm:$0xff]
  %v62 = vld [vmem:[%s1 + $0x160] sm:$0xff]
  %v63 = vld [vmem:[%s1 + $0x168] sm:$0xff]
  %v64 = vld [vmem:[%s1 + $0x170] sm:$0xff]
  %v65 = vld [vmem:[%s1 + $0x178] sm:$0xff]
  %v66 = vld [vmem:[%s1 + $0x180] sm:$0xff]
  %v67 = vld [vmem:[%s1 + $0x188] sm:$0xff]
  %v68 = vld [vmem:[%s1 + $0x190] sm:$0xff]
  %v69 = vld [vmem:[%s1 + $0x198] sm:$0xff]
  %v70 = vld [vmem:[%s1 + $0x1a0] sm:$0xff]
  %v71 = vld [vmem:[%s1 + $0x1a8] sm:$0xff]
  %v72 = vld [vmem:[%s1 + $0x1b0] sm:$0xff]
  %v73 = vld [vmem:[%s1 + $0x1b8] sm:$0xff]
  %v74 = vld [vmem:[%s1 + $0x1c0] sm:$0xff]
  %v75 = vld [vmem:[%s1 + $0x1c8] sm:$0xff]
  %v76 = vld [vmem:[%s1 + $0x1d0] sm:$0xff]
  %v77 = vld [vmem:[%s1 + $0x1d8] sm:$0xff]
  %v78 = vld [vmem:[%s1 + $0x1e0] sm:$0xff]
  %v79 = vld [vmem:[%s1 + $0x1e8] sm:$0xff]
  %v80 = vld [vmem:[%s1 + $0x1f0] sm:$0xff]
  %v81 = vld [vmem:[%s1 + $0x1f8] sm:$0xff]
  %v82 = vld [vmem:[%s1 + $0x200] sm:$0xff]
  %v83 = vld [vmem:[%s1 + $0x208] sm:$0xff]
  %v84 = vld [vmem:[%s1 + $0x210] sm:$0xff]
  %v85 = vld [vmem:[%s1 + $0x218] sm:$0xff]
  %v86 = vld [vmem:[%s1 + $0x220] sm:$0xff]
  %v87 = vld [vmem:[%s1 + $0x228] sm:$0xff]
  %v88 = vld [vmem:[%s1 + $0x230] sm:$0xff]
  %v89 = vld [vmem:[%s1 + $0x238] sm:$0xff]
  %v90 = vld [vmem:[%s1 + $0x240] sm:$0xff]
  %v91 = vld [vmem:[%s1 + $0x248] sm:$0xff]
  %v92 = vld [vmem:[%s1 + $0x250] sm:$0xff]
  %v93 = vld [vmem:[%s1 + $0x258] sm:$0xff]
  %v94 = vld [vmem:[%s1 + $0x260] sm:$0xff]
  %v95 = vld [vmem:[%s1 + $0x268] sm:$0xff]
  %v96 = vld [vmem:[%s1 + $0x270] sm:$0xff]
  %v97 = vld [vmem:[%s1 + $0x278] sm:$0xff]
  %v98 = vld [vmem:[%s1 + $0x280] sm:$0xff]
  %v99 = vld [vmem:[%s1 + $0x288] sm:$0xff]
  %v100 = vld [vmem:[%s1 + $0x290] sm:$0xff]
  %v101 = vld [vmem:[%s1 + $0x298] sm:$0xff]
  %v102 = vld [vmem:[%s1 + $0x2a0] sm:$0xff]
  %v103 = vld [vmem:[%s1 + $0x2a8] sm:$0xff]
  %v104 = vld [vmem:[%s1 + $0x2b0] sm:$0xff]
  %v105 = vld [vmem:[%s1 + $0x2b8] sm:$0xff]
  %v106 = vld [vmem:[%s1 + $0x2c0] sm:$0xff]
  %v107 = vld [vmem:[%s1 + $0x2c8] sm:$0xff]
  %v108 = vld [vmem:[%s1 + $0x2d0] sm:$0xff]
  %v109 = vld [vmem:[%s1 + $0x2d8] sm:$0xff]
  %v110 = vld [vmem:[%s1 + $0x2e0] sm:$0xff]
  %v111 = vld [vmem:[%s1 + $0x2e8] sm:$0xff]
  %v112 = vld [vmem:[%s1 + $0x2f0] sm:$0xff]
  %v113 = vld [vmem:[%s1 + $0x2f8] sm:$0xff]
  %v114 = vld [vmem:[%s1 + $0x300] sm:$0xff]
  %v115 = vld [vmem:[%s1 + $0x308] sm:$0xff]
  %v116 = vld [vmem:[%s1 + $0x310] sm:$0xff]
  %v117 = vld [vmem:[%s1 + $0x318] sm:$0xff]
  %v118 = vld [vmem:[%s1 + $0x320] sm:$0xff]
  %v119 = vld [vmem:[%s1 + $0x328] sm:$0xff]
  %v120 = vld [vmem:[%s1 + $0x330] sm:$0xff]
  %v121 = vld [vmem:[%s1 + $0x338] sm:$0xff]
  %v122 = vld [vmem:[%s1 + $0x340] sm:$0xff]
  %v123 = vld [vmem:[%s1 + $0x348] sm:$0xff]
  %v124 = vld [vmem:[%s1 + $0x350] sm:$0xff]
  %v125 = vld [vmem:[%s1 + $0x358] sm:$0xff]
  %v126 = vld [vmem:[%s1 + $0x360] sm:$0xff]
  %v127 = vld [vmem:[%s1 + $0x368] sm:$0xff]
  %v128 = vld [vmem:[%s1 + $0x370] sm:$0xff]
  %v129 = vld [vmem:[%s1 + $0x378] sm:$0xff]
  %v130 = vld [vmem:[%s1 + $0x380] sm:$0xff]
  %v131 = vld [vmem:[%s1 + $0x388] sm:$0xff]
  %v132 = vld [vmem:[%s1 + $0x390] sm:$0xff]
  %v133 = vld [vmem:[%s1 + $0x398] sm:$0xff]
  %v134 = vld [vmem:[%s1 + $0x3a0] sm:$0xff]
  %v135 = vld [vmem:[%s1 + $0x3a8] sm:$0xff]
  %v136 = vld [vmem:[%s1 + $0x3b0] sm:$0xff]
  %v137 = vld [vmem:[%s1 + $0x3b8] sm:$0xff]
  %v138 = vld [vmem:[%s1 + $0x3c0] sm:$0xff]
  %v139 = vld [vmem:[%s1 + $0x3c8] sm:$0xff]
  %v140 = vld [vmem:[%s1 + $0x3d0] sm:$0xff]
  %v141 = vld [vmem:[%s1 + $0x3d8] sm:$0xff]
  %v142 = vld [vmem:[%s1 + $0x3e0] sm:$0xff]
  %v143 = vld [vmem:[%s1 + $0x3e8] sm:$0xff]
  %v144 = vld [vmem:[%s1 + $0x3f0] sm:$0xff]
  %v145 = vld [vmem:[%s1 + $0x3f8] sm:$0xff]
  %v146 = vld [vmem:[%s2] sm:$0x1]
  %v148 = vperm.slane %v146, 0
  %154 = vst [vmem:[#allocation1] ss:$2 sm:$0xff] %v14
  %s155 = scalar_lea.vmem [#allocation1], 16
  %156 = vst [vmem:[%s155] ss:$2 sm:$0xff] %v15
  %s157 = scalar_lea.vmem [#allocation1], 32
  %158 = vst [vmem:[%s157] ss:$2 sm:$0xff] %v16
  %s159 = scalar_lea.vmem [#allocation1], 48
  %160 = vst [vmem:[%s159] ss:$2 sm:$0xff] %v17
  %v161 = vld.sshfl [vmem:[#allocation1] sm:$0xff pattern:$0x75316420]
  %v162 = vld.sshfl [vmem:[#allocation1 + $0x8] sm:$0xff pattern:$0x75316420]
  %v163 = vld.sshfl [vmem:[#allocation1 + $0x10] sm:$0xff pattern:$0x75316420]
  %v164 = vld.sshfl [vmem:[#allocation1 + $0x18] sm:$0xff pattern:$0x75316420]
  %v165 = vld.sshfl [vmem:[#allocation1 + $0x20] sm:$0xff pattern:$0x75316420]
  %v166 = vld.sshfl [vmem:[#allocation1 + $0x28] sm:$0xff pattern:$0x75316420]
  %v167 = vld.sshfl [vmem:[#allocation1 + $0x30] sm:$0xff pattern:$0x75316420]
  %v168 = vld.sshfl [vmem:[#allocation1 + $0x38] sm:$0xff pattern:$0x75316420]
  %v177 = vand.u32 %v33, 4294901760
  %178 = vmatpush.msra.mxu0 %v177
  %v179 = vand.u32 %v32, 4294901760
  %180 = vmatpush.msra.mxu0 %v179
  %v181 = vand.u32 %v31, 4294901760
  %182 = vmatpush.msra.mxu0 %v181
  %v183 = vand.u32 %v30, 4294901760
  %184 = vmatpush.msra.mxu0 %v183
  %v185 = vand.u32 %v29, 4294901760
  %186 = vmatpush.msra.mxu0 %v185
  %v187 = vand.u32 %v28, 4294901760
  %188 = vmatpush.msra.mxu0 %v187
  %v189 = vand.u32 %v27, 4294901760
  %190 = vmatpush.msra.mxu0 %v189
  %v191 = vand.u32 %v26, 4294901760
  %192 = vmatpush.msra.mxu0 %v191
  %v193 = vand.u32 %v25, 4294901760
  %194 = vmatpush.msra.mxu0 %v193
  %v195 = vand.u32 %v24, 4294901760
  %196 = vmatpush.msra.mxu0 %v195
  %v197 = vand.u32 %v23, 4294901760
  %198 = vmatpush.msra.mxu0 %v197
  %v199 = vand.u32 %v22, 4294901760
  %200 = vmatpush.msra.mxu0 %v199
  %v201 = vand.u32 %v21, 4294901760
  %202 = vmatpush.msra.mxu0 %v201
  %v203 = vand.u32 %v20, 4294901760
  %204 = vmatpush.msra.mxu0 %v203
  %v205 = vand.u32 %v19, 4294901760
  %206 = vmatpush.msra.mxu0 %v205
  %v207 = vand.u32 %v18, 4294901760
  %208 = vmatpush.msra.mxu0 %v207
  %v209 = vand.u32 %v161, 4294901760
  %v210 = vsub.f32 %v161, %v209
  %v211 = vand.u32 %v210, 4294901760
  %v212 = vsub.f32 %v210, %v211
  %v213 = vand.u32 %v212, 4294901760
  %214 = vmatmul.f32.gmra.mxu0 %v213
  %v215 = vpop.f32.mrf.mxu0
  %v216 = vadd.f32 %v148, %v215
  %217 = vdwg.mxu0
  %v218 = vand.u32 %v33, 4294901760
  %v219 = vsub.f32 %v33, %v218
  %v220 = vand.u32 %v219, 4294901760
  %v221 = vsub.f32 %v219, %v220
  %v222 = vand.u32 %v221, 4294901760
  %223 = vmatpush.msra.mxu0 %v222
  %v224 = vand.u32 %v32, 4294901760
  %v225 = vsub.f32 %v32, %v224
  %v226 = vand.u32 %v225, 4294901760
  %v227 = vsub.f32 %v225, %v226
  %v228 = vand.u32 %v227, 4294901760
  %229 = vmatpush.msra.mxu0 %v228
  %v230 = vand.u32 %v31, 4294901760
  %v231 = vsub.f32 %v31, %v230
  %v232 = vand.u32 %v231, 4294901760
  %v233 = vsub.f32 %v231, %v232
  %v234 = vand.u32 %v233, 4294901760
  %235 = vmatpush.msra.mxu0 %v234
  %v236 = vand.u32 %v30, 4294901760
  %v237 = vsub.f32 %v30, %v236
  %v238 = vand.u32 %v237, 4294901760
  %v239 = vsub.f32 %v237, %v238
  %v240 = vand.u32 %v239, 4294901760
  %241 = vmatpush.msra.mxu0 %v240
  %v242 = vand.u32 %v29, 4294901760
  %v243 = vsub.f32 %v29, %v242
  %v244 = vand.u32 %v243, 4294901760
  %v245 = vsub.f32 %v243, %v244
  %v246 = vand.u32 %v245, 4294901760
  %247 = vmatpush.msra.mxu0 %v246
  %v248 = vand.u32 %v28, 4294901760
  %v249 = vsub.f32 %v28, %v248
  %v250 = vand.u32 %v249, 4294901760
  %v251 = vsub.f32 %v249, %v250
  %v252 = vand.u32 %v251, 4294901760
  %253 = vmatpush.msra.mxu0 %v252
  %v254 = vand.u32 %v27, 4294901760
  %v255 = vsub.f32 %v27, %v254
  %v256 = vand.u32 %v255, 4294901760
  %v257 = vsub.f32 %v255, %v256
  %v258 = vand.u32 %v257, 4294901760
  %259 = vmatpush.msra.mxu0 %v258
  %v260 = vand.u32 %v26, 4294901760
  %v261 = vsub.f32 %v26, %v260
  %v262 = vand.u32 %v261, 4294901760
  %v263 = vsub.f32 %v261, %v262
  %v264 = vand.u32 %v263, 4294901760
  %265 = vmatpush.msra.mxu0 %v264
  %v266 = vand.u32 %v25, 4294901760
  %v267 = vsub.f32 %v25, %v266
  %v268 = vand.u32 %v267, 4294901760
  %v269 = vsub.f32 %v267, %v268
  %v270 = vand.u32 %v269, 4294901760
  %271 = vmatpush.msra.mxu0 %v270
  %v272 = vand.u32 %v24, 4294901760
  %v273 = vsub.f32 %v24, %v272
  %v274 = vand.u32 %v273, 4294901760
  %v275 = vsub.f32 %v273, %v274
  %v276 = vand.u32 %v275, 4294901760
  %277 = vmatpush.msra.mxu0 %v276
  %v278 = vand.u32 %v23, 4294901760
  %v279 = vsub.f32 %v23, %v278
  %v280 = vand.u32 %v279, 4294901760
  %v281 = vsub.f32 %v279, %v280
  %v282 = vand.u32 %v281, 4294901760
  %283 = vmatpush.msra.mxu0 %v282
  %v284 = vand.u32 %v22, 4294901760
  %v285 = vsub.f32 %v22, %v284
  %v286 = vand.u32 %v285, 4294901760
  %v287 = vsub.f32 %v285, %v286
  %v288 = vand.u32 %v287, 4294901760
  %289 = vmatpush.msra.mxu0 %v288
  %v290 = vand.u32 %v21, 4294901760
  %v291 = vsub.f32 %v21, %v290
  %v292 = vand.u32 %v291, 4294901760
  %v293 = vsub.f32 %v291, %v292
  %v294 = vand.u32 %v293, 4294901760
  %295 = vmatpush.msra.mxu0 %v294
  %v296 = vand.u32 %v20, 4294901760
  %v297 = vsub.f32 %v20, %v296
  %v298 = vand.u32 %v297, 4294901760
  %v299 = vsub.f32 %v297, %v298
  %v300 = vand.u32 %v299, 4294901760
  %301 = vmatpush.msra.mxu0 %v300
  %v302 = vand.u32 %v19, 4294901760
  %v303 = vsub.f32 %v19, %v302
  %v304 = vand.u32 %v303, 4294901760
  %v305 = vsub.f32 %v303, %v304
  %v306 = vand.u32 %v305, 4294901760
  %307 = vmatpush.msra.mxu0 %v306
  %v308 = vand.u32 %v18, 4294901760
  %v309 = vsub.f32 %v18, %v308
  %v310 = vand.u32 %v309, 4294901760
  %v311 = vsub.f32 %v309, %v310
  %v312 = vand.u32 %v311, 4294901760
  %313 = vmatpush.msra.mxu0 %v312
  %v314 = vand.u32 %v161, 4294901760
  %315 = vmatmul.f32.gmra.mxu0 %v314
  %v316 = vpop.f32.mrf.mxu0
  %v317 = vadd.f32 %v216, %v316
  %318 = vdwg.mxu0
  %v319 = vand.u32 %v33, 4294901760
  %v320 = vsub.f32 %v33, %v319
  %321 = vmatpush.msra.mxu0 %v320
  %v322 = vand.u32 %v32, 4294901760
  %v323 = vsub.f32 %v32, %v322
  %324 = vmatpush.msra.mxu0 %v323
  %v325 = vand.u32 %v31, 4294901760
  %v326 = vsub.f32 %v31, %v325
  %327 = vmatpush.msra.mxu0 %v326
  %v328 = vand.u32 %v30, 4294901760
  %v329 = vsub.f32 %v30, %v328
  %330 = vmatpush.msra.mxu0 %v329
  %v331 = vand.u32 %v29, 4294901760
  %v332 = vsub.f32 %v29, %v331
  %333 = vmatpush.msra.mxu0 %v332
  %v334 = vand.u32 %v28, 4294901760
  %v335 = vsub.f32 %v28, %v334
  %336 = vmatpush.msra.mxu0 %v335
  %v337 = vand.u32 %v27, 4294901760
  %v338 = vsub.f32 %v27, %v337
  %339 = vmatpush.msra.mxu0 %v338
  %v340 = vand.u32 %v26, 4294901760
  %v341 = vsub.f32 %v26, %v340
  %342 = vmatpush.msra.mxu0 %v341
  %v343 = vand.u32 %v25, 4294901760
  %v344 = vsub.f32 %v25, %v343
  %345 = vmatpush.msra.mxu0 %v344
  %v346 = vand.u32 %v24, 4294901760
  %v347 = vsub.f32 %v24, %v346
  %348 = vmatpush.msra.mxu0 %v347
  %v349 = vand.u32 %v23, 4294901760
  %v350 = vsub.f32 %v23, %v349
  %351 = vmatpush.msra.mxu0 %v350
  %v352 = vand.u32 %v22, 4294901760
  %v353 = vsub.f32 %v22, %v352
  %354 = vmatpush.msra.mxu0 %v353
  %v355 = vand.u32 %v21, 4294901760
  %v356 = vsub.f32 %v21, %v355
  %357 = vmatpush.msra.mxu0 %v356
  %v358 = vand.u32 %v20, 4294901760
  %v359 = vsub.f32 %v20, %v358
  %360 = vmatpush.msra.mxu0 %v359
  %v361 = vand.u32 %v19, 4294901760
  %v362 = vsub.f32 %v19, %v361
  %363 = vmatpush.msra.mxu0 %v362
  %v364 = vand.u32 %v18, 4294901760
  %v365 = vsub.f32 %v18, %v364
  %366 = vmatpush.msra.mxu0 %v365
  %v367 = vand.u32 %v161, 4294901760
  %v368 = vsub.f32 %v161, %v367
  %369 = vmatmul.f32.gmra.mxu0 %v368
  %v370 = vpop.f32.mrf.mxu0
  %v371 = vadd.f32 %v317, %v370
  %372 = vdwg.mxu0
  %v373 = vand.u32 %v33, 4294901760
  %374 = vmatpush.msra.mxu0 %v373
  %v375 = vand.u32 %v32, 4294901760
  %376 = vmatpush.msra.mxu0 %v375
  %v377 = vand.u32 %v31, 4294901760
  %378 = vmatpush.msra.mxu0 %v377
  %v379 = vand.u32 %v30, 4294901760
  %380 = vmatpush.msra.mxu0 %v379
  %v381 = vand.u32 %v29, 4294901760
  %382 = vmatpush.msra.mxu0 %v381
  %v383 = vand.u32 %v28, 4294901760
  %384 = vmatpush.msra.mxu0 %v383
  %v385 = vand.u32 %v27, 4294901760
  %386 = vmatpush.msra.mxu0 %v385
  %v387 = vand.u32 %v26, 4294901760
  %388 = vmatpush.msra.mxu0 %v387
  %v389 = vand.u32 %v25, 4294901760
  %390 = vmatpush.msra.mxu0 %v389
  %v391 = vand.u32 %v24, 4294901760
  %392 = vmatpush.msra.mxu0 %v391
  %v393 = vand.u32 %v23, 4294901760
  %394 = vmatpush.msra.mxu0 %v393
  %v395 = vand.u32 %v22, 4294901760
  %396 = vmatpush.msra.mxu0 %v395
  %v397 = vand.u32 %v21, 4294901760
  %398 = vmatpush.msra.mxu0 %v397
  %v399 = vand.u32 %v20, 4294901760
  %400 = vmatpush.msra.mxu0 %v399
  %v401 = vand.u32 %v19, 4294901760
  %402 = vmatpush.msra.mxu0 %v401
  %v403 = vand.u32 %v18, 4294901760
  %404 = vmatpush.msra.mxu0 %v403
  %v405 = vand.u32 %v161, 4294901760
  %v406 = vsub.f32 %v161, %v405
  %v407 = vand.u32 %v406, 4294901760
  %408 = vmatmul.f32.gmra.mxu0 %v407
  %v409 = vpop.f32.mrf.mxu0
  %v410 = vadd.f32 %v371, %v409
  %411 = vdwg.mxu0
  %v412 = vand.u32 %v33, 4294901760
  %v413 = vsub.f32 %v33, %v412
  %v414 = vand.u32 %v413, 4294901760
  %415 = vmatpush.msra.mxu0 %v414
  %v416 = vand.u32 %v32, 4294901760
  %v417 = vsub.f32 %v32, %v416
  %v418 = vand.u32 %v417, 4294901760
  %419 = vmatpush.msra.mxu0 %v418
  %v420 = vand.u32 %v31, 4294901760
  %v421 = vsub.f32 %v31, %v420
  %v422 = vand.u32 %v421, 4294901760
  %423 = vmatpush.msra.mxu0 %v422
  %v424 = vand.u32 %v30, 4294901760
  %v425 = vsub.f32 %v30, %v424
  %v426 = vand.u32 %v425, 4294901760
  %427 = vmatpush.msra.mxu0 %v426
  %v428 = vand.u32 %v29, 4294901760
  %v429 = vsub.f32 %v29, %v428
  %v430 = vand.u32 %v429, 4294901760
  %431 = vmatpush.msra.mxu0 %v430
  %v432 = vand.u32 %v28, 4294901760
  %v433 = vsub.f32 %v28, %v432
  %v434 = vand.u32 %v433, 4294901760
  %435 = vmatpush.msra.mxu0 %v434
  %v436 = vand.u32 %v27, 4294901760
  %v437 = vsub.f32 %v27, %v436
  %v438 = vand.u32 %v437, 4294901760
  %439 = vmatpush.msra.mxu0 %v438
  %v440 = vand.u32 %v26, 4294901760
  %v441 = vsub.f32 %v26, %v440
  %v442 = vand.u32 %v441, 4294901760
  %443 = vmatpush.msra.mxu0 %v442
  %v444 = vand.u32 %v25, 4294901760
  %v445 = vsub.f32 %v25, %v444
  %v446 = vand.u32 %v445, 4294901760
  %447 = vmatpush.msra.mxu0 %v446
  %v448 = vand.u32 %v24, 4294901760
  %v449 = vsub.f32 %v24, %v448
  %v450 = vand.u32 %v449, 4294901760
  %451 = vmatpush.msra.mxu0 %v450
  %v452 = vand.u32 %v23, 4294901760
  %v453 = vsub.f32 %v23, %v452
  %v454 = vand.u32 %v453, 4294901760
  %455 = vmatpush.msra.mxu0 %v454
  %v456 = vand.u32 %v22, 4294901760
  %v457 = vsub.f32 %v22, %v456
  %v458 = vand.u32 %v457, 4294901760
  %459 = vmatpush.msra.mxu0 %v458
  %v460 = vand.u32 %v21, 4294901760
  %v461 = vsub.f32 %v21, %v460
  %v462 = vand.u32 %v461, 4294901760
  %463 = vmatpush.msra.mxu0 %v462
  %v464 = vand.u32 %v20, 4294901760
  %v465 = vsub.f32 %v20, %v464
  %v466 = vand.u32 %v465, 4294901760
  %467 = vmatpush.msra.mxu0 %v466
  %v468 = vand.u32 %v19, 4294901760
  %v469 = vsub.f32 %v19, %v468
  %v470 = vand.u32 %v469, 4294901760
  %471 = vmatpush.msra.mxu0 %v470
  %v472 = vand.u32 %v18, 4294901760
  %v473 = vsub.f32 %v18, %v472
  %v474 = vand.u32 %v473, 4294901760
  %475 = vmatpush.msra.mxu0 %v474
  %v476 = vand.u32 %v161, 4294901760
  %477 = vmatmul.f32.gmra.mxu0 %v476
  %v478 = vpop.f32.mrf.mxu0
  %v479 = vadd.f32 %v410, %v478
  %480 = vdwg.mxu0
  %v481 = vand.u32 %v33, 4294901760
  %482 = vmatpush.msra.mxu0 %v481
  %v483 = vand.u32 %v32, 4294901760
  %484 = vmatpush.msra.mxu0 %v483
  %v485 = vand.u32 %v31, 4294901760
  %486 = vmatpush.msra.mxu0 %v485
  %v487 = vand.u32 %v30, 4294901760
  %488 = vmatpush.msra.mxu0 %v487
  %v489 = vand.u32 %v29, 4294901760
  %490 = vmatpush.msra.mxu0 %v489
  %v491 = vand.u32 %v28, 4294901760
  %492 = vmatpush.msra.mxu0 %v491
  %v493 = vand.u32 %v27, 4294901760
  %494 = vmatpush.msra.mxu0 %v493
  %v495 = vand.u32 %v26, 4294901760
  %496 = vmatpush.msra.mxu0 %v495
  %v497 = vand.u32 %v25, 4294901760
  %498 = vmatpush.msra.mxu0 %v497
  %v499 = vand.u32 %v24, 4294901760
  %500 = vmatpush.msra.mxu0 %v499
  %v501 = vand.u32 %v23, 4294901760
  %502 = vmatpush.msra.mxu0 %v501
  %v503 = vand.u32 %v22, 4294901760
  %504 = vmatpush.msra.mxu0 %v503
  %v505 = vand.u32 %v21, 4294901760
  %506 = vmatpush.msra.mxu0 %v505
  %v507 = vand.u32 %v20, 4294901760
  %508 = vmatpush.msra.mxu0 %v507
  %v509 = vand.u32 %v19, 4294901760
  %510 = vmatpush.msra.mxu0 %v509
  %v511 = vand.u32 %v18, 4294901760
  %512 = vmatpush.msra.mxu0 %v511
  %v513 = vand.u32 %v161, 4294901760
  %514 = vmatmul.f32.gmra.mxu0 %v513
  %v515 = vpop.f32.mrf.mxu0
  %v516 = vadd.f32 %v479, %v515
  %517 = vdwg.mxu0
  %v518 = vand.u32 %v49, 4294901760
  %519 = vmatpush.msra.mxu0 %v518
  %v520 = vand.u32 %v48, 4294901760
  %521 = vmatpush.msra.mxu0 %v520
  %v522 = vand.u32 %v47, 4294901760
  %523 = vmatpush.msra.mxu0 %v522
  %v524 = vand.u32 %v46, 4294901760
  %525 = vmatpush.msra.mxu0 %v524
  %v526 = vand.u32 %v45, 4294901760
  %527 = vmatpush.msra.mxu0 %v526
  %v528 = vand.u32 %v44, 4294901760
  %529 = vmatpush.msra.mxu0 %v528
  %v530 = vand.u32 %v43, 4294901760
  %531 = vmatpush.msra.mxu0 %v530
  %v532 = vand.u32 %v42, 4294901760
  %533 = vmatpush.msra.mxu0 %v532
  %v534 = vand.u32 %v41, 4294901760
  %535 = vmatpush.msra.mxu0 %v534
  %v536 = vand.u32 %v40, 4294901760
  %537 = vmatpush.msra.mxu0 %v536
  %v538 = vand.u32 %v39, 4294901760
  %539 = vmatpush.msra.mxu0 %v538
  %v540 = vand.u32 %v38, 4294901760
  %541 = vmatpush.msra.mxu0 %v540
  %v542 = vand.u32 %v37, 4294901760
  %543 = vmatpush.msra.mxu0 %v542
  %v544 = vand.u32 %v36, 4294901760
  %545 = vmatpush.msra.mxu0 %v544
  %v546 = vand.u32 %v35, 4294901760
  %547 = vmatpush.msra.mxu0 %v546
  %v548 = vand.u32 %v34, 4294901760
  %549 = vmatpush.msra.mxu0 %v548
  %v550 = vand.u32 %v162, 4294901760
  %v551 = vsub.f32 %v162, %v550
  %v552 = vand.u32 %v551, 4294901760
  %v553 = vsub.f32 %v551, %v552
  %v554 = vand.u32 %v553, 4294901760
  %555 = vmatmul.f32.gmra.mxu0 %v554
  %v556 = vpop.f32.mrf.mxu0
  %v557 = vadd.f32 %v516, %v556
  %558 = vdwg.mxu0
  %v559 = vand.u32 %v49, 4294901760
  %v560 = vsub.f32 %v49, %v559
  %v561 = vand.u32 %v560, 4294901760
  %v562 = vsub.f32 %v560, %v561
  %v563 = vand.u32 %v562, 4294901760
  %564 = vmatpush.msra.mxu0 %v563
  %v565 = vand.u32 %v48, 4294901760
  %v566 = vsub.f32 %v48, %v565
  %v567 = vand.u32 %v566, 4294901760
  %v568 = vsub.f32 %v566, %v567
  %v569 = vand.u32 %v568, 4294901760
  %570 = vmatpush.msra.mxu0 %v569
  %v571 = vand.u32 %v47, 4294901760
  %v572 = vsub.f32 %v47, %v571
  %v573 = vand.u32 %v572, 4294901760
  %v574 = vsub.f32 %v572, %v573
  %v575 = vand.u32 %v574, 4294901760
  %576 = vmatpush.msra.mxu0 %v575
  %v577 = vand.u32 %v46, 4294901760
  %v578 = vsub.f32 %v46, %v577
  %v579 = vand.u32 %v578, 4294901760
  %v580 = vsub.f32 %v578, %v579
  %v581 = vand.u32 %v580, 4294901760
  %582 = vmatpush.msra.mxu0 %v581
  %v583 = vand.u32 %v45, 4294901760
  %v584 = vsub.f32 %v45, %v583
  %v585 = vand.u32 %v584, 4294901760
  %v586 = vsub.f32 %v584, %v585
  %v587 = vand.u32 %v586, 4294901760
  %588 = vmatpush.msra.mxu0 %v587
  %v589 = vand.u32 %v44, 4294901760
  %v590 = vsub.f32 %v44, %v589
  %v591 = vand.u32 %v590, 4294901760
  %v592 = vsub.f32 %v590, %v591
  %v593 = vand.u32 %v592, 4294901760
  %594 = vmatpush.msra.mxu0 %v593
  %v595 = vand.u32 %v43, 4294901760
  %v596 = vsub.f32 %v43, %v595
  %v597 = vand.u32 %v596, 4294901760
  %v598 = vsub.f32 %v596, %v597
  %v599 = vand.u32 %v598, 4294901760
  %600 = vmatpush.msra.mxu0 %v599
  %v601 = vand.u32 %v42, 4294901760
  %v602 = vsub.f32 %v42, %v601
  %v603 = vand.u32 %v602, 4294901760
  %v604 = vsub.f32 %v602, %v603
  %v605 = vand.u32 %v604, 4294901760
  %606 = vmatpush.msra.mxu0 %v605
  %v607 = vand.u32 %v41, 4294901760
  %v608 = vsub.f32 %v41, %v607
  %v609 = vand.u32 %v608, 4294901760
  %v610 = vsub.f32 %v608, %v609
  %v611 = vand.u32 %v610, 4294901760
  %612 = vmatpush.msra.mxu0 %v611
  %v613 = vand.u32 %v40, 4294901760
  %v614 = vsub.f32 %v40, %v613
  %v615 = vand.u32 %v614, 4294901760
  %v616 = vsub.f32 %v614, %v615
  %v617 = vand.u32 %v616, 4294901760
  %618 = vmatpush.msra.mxu0 %v617
  %v619 = vand.u32 %v39, 4294901760
  %v620 = vsub.f32 %v39, %v619
  %v621 = vand.u32 %v620, 4294901760
  %v622 = vsub.f32 %v620, %v621
  %v623 = vand.u32 %v622, 4294901760
  %624 = vmatpush.msra.mxu0 %v623
  %v625 = vand.u32 %v38, 4294901760
  %v626 = vsub.f32 %v38, %v625
  %v627 = vand.u32 %v626, 4294901760
  %v628 = vsub.f32 %v626, %v627
  %v629 = vand.u32 %v628, 4294901760
  %630 = vmatpush.msra.mxu0 %v629
  %v631 = vand.u32 %v37, 4294901760
  %v632 = vsub.f32 %v37, %v631
  %v633 = vand.u32 %v632, 4294901760
  %v634 = vsub.f32 %v632, %v633
  %v635 = vand.u32 %v634, 4294901760
  %636 = vmatpush.msra.mxu0 %v635
  %v637 = vand.u32 %v36, 4294901760
  %v638 = vsub.f32 %v36, %v637
  %v639 = vand.u32 %v638, 4294901760
  %v640 = vsub.f32 %v638, %v639
  %v641 = vand.u32 %v640, 4294901760
  %642 = vmatpush.msra.mxu0 %v641
  %v643 = vand.u32 %v35, 4294901760
  %v644 = vsub.f32 %v35, %v643
  %v645 = vand.u32 %v644, 4294901760
  %v646 = vsub.f32 %v644, %v645
  %v647 = vand.u32 %v646, 4294901760
  %648 = vmatpush.msra.mxu0 %v647
  %v649 = vand.u32 %v34, 4294901760
  %v650 = vsub.f32 %v34, %v649
  %v651 = vand.u32 %v650, 4294901760
  %v652 = vsub.f32 %v650, %v651
  %v653 = vand.u32 %v652, 4294901760
  %654 = vmatpush.msra.mxu0 %v653
  %v655 = vand.u32 %v162, 4294901760
  %656 = vmatmul.f32.gmra.mxu0 %v655
  %v657 = vpop.f32.mrf.mxu0
  %v658 = vadd.f32 %v557, %v657
  %659 = vdwg.mxu0
  %v660 = vand.u32 %v49, 4294901760
  %v661 = vsub.f32 %v49, %v660
  %662 = vmatpush.msra.mxu0 %v661
  %v663 = vand.u32 %v48, 4294901760
  %v664 = vsub.f32 %v48, %v663
  %665 = vmatpush.msra.mxu0 %v664
  %v666 = vand.u32 %v47, 4294901760
  %v667 = vsub.f32 %v47, %v666
  %668 = vmatpush.msra.mxu0 %v667
  %v669 = vand.u32 %v46, 4294901760
  %v670 = vsub.f32 %v46, %v669
  %671 = vmatpush.msra.mxu0 %v670
  %v672 = vand.u32 %v45, 4294901760
  %v673 = vsub.f32 %v45, %v672
  %674 = vmatpush.msra.mxu0 %v673
  %v675 = vand.u32 %v44, 4294901760
  %v676 = vsub.f32 %v44, %v675
  %677 = vmatpush.msra.mxu0 %v676
  %v678 = vand.u32 %v43, 4294901760
  %v679 = vsub.f32 %v43, %v678
  %680 = vmatpush.msra.mxu0 %v679
  %v681 = vand.u32 %v42, 4294901760
  %v682 = vsub.f32 %v42, %v681
  %683 = vmatpush.msra.mxu0 %v682
  %v684 = vand.u32 %v41, 4294901760
  %v685 = vsub.f32 %v41, %v684
  %686 = vmatpush.msra.mxu0 %v685
  %v687 = vand.u32 %v40, 4294901760
  %v688 = vsub.f32 %v40, %v687
  %689 = vmatpush.msra.mxu0 %v688
  %v690 = vand.u32 %v39, 4294901760
  %v691 = vsub.f32 %v39, %v690
  %692 = vmatpush.msra.mxu0 %v691
  %v693 = vand.u32 %v38, 4294901760
  %v694 = vsub.f32 %v38, %v693
  %695 = vmatpush.msra.mxu0 %v694
  %v696 = vand.u32 %v37, 4294901760
  %v697 = vsub.f32 %v37, %v696
  %698 = vmatpush.msra.mxu0 %v697
  %v699 = vand.u32 %v36, 4294901760
  %v700 = vsub.f32 %v36, %v699
  %701 = vmatpush.msra.mxu0 %v700
  %v702 = vand.u32 %v35, 4294901760
  %v703 = vsub.f32 %v35, %v702
  %704 = vmatpush.msra.mxu0 %v703
  %v705 = vand.u32 %v34, 4294901760
  %v706 = vsub.f32 %v34, %v705
  %707 = vmatpush.msra.mxu0 %v706
  %v708 = vand.u32 %v162, 4294901760
  %v709 = vsub.f32 %v162, %v708
  %710 = vmatmul.f32.gmra.mxu0 %v709
  %v711 = vpop.f32.mrf.mxu0
  %v712 = vadd.f32 %v658, %v711
  %713 = vdwg.mxu0
  %v714 = vand.u32 %v49, 4294901760
  %715 = vmatpush.msra.mxu0 %v714
  %v716 = vand.u32 %v48, 4294901760
  %717 = vmatpush.msra.mxu0 %v716
  %v718 = vand.u32 %v47, 4294901760
  %719 = vmatpush.msra.mxu0 %v718
  %v720 = vand.u32 %v46, 4294901760
  %721 = vmatpush.msra.mxu0 %v720
  %v722 = vand.u32 %v45, 4294901760
  %723 = vmatpush.msra.mxu0 %v722
  %v724 = vand.u32 %v44, 4294901760
  %725 = vmatpush.msra.mxu0 %v724
  %v726 = vand.u32 %v43, 4294901760
  %727 = vmatpush.msra.mxu0 %v726
  %v728 = vand.u32 %v42, 4294901760
  %729 = vmatpush.msra.mxu0 %v728
  %v730 = vand.u32 %v41, 4294901760
  %731 = vmatpush.msra.mxu0 %v730
  %v732 = vand.u32 %v40, 4294901760
  %733 = vmatpush.msra.mxu0 %v732
  %v734 = vand.u32 %v39, 4294901760
  %735 = vmatpush.msra.mxu0 %v734
  %v736 = vand.u32 %v38, 4294901760
  %737 = vmatpush.msra.mxu0 %v736
  %v738 = vand.u32 %v37, 4294901760
  %739 = vmatpush.msra.mxu0 %v738
  %v740 = vand.u32 %v36, 4294901760
  %741 = vmatpush.msra.mxu0 %v740
  %v742 = vand.u32 %v35, 4294901760
  %743 = vmatpush.msra.mxu0 %v742
  %v744 = vand.u32 %v34, 4294901760
  %745 = vmatpush.msra.mxu0 %v744
  %v746 = vand.u32 %v162, 4294901760
  %v747 = vsub.f32 %v162, %v746
  %v748 = vand.u32 %v747, 4294901760
  %749 = vmatmul.f32.gmra.mxu0 %v748
  %v750 = vpop.f32.mrf.mxu0
  %v751 = vadd.f32 %v712, %v750
  %752 = vdwg.mxu0
  %v753 = vand.u32 %v49, 4294901760
  %v754 = vsub.f32 %v49, %v753
  %v755 = vand.u32 %v754, 4294901760
  %756 = vmatpush.msra.mxu0 %v755
  %v757 = vand.u32 %v48, 4294901760
  %v758 = vsub.f32 %v48, %v757
  %v759 = vand.u32 %v758, 4294901760
  %760 = vmatpush.msra.mxu0 %v759
  %v761 = vand.u32 %v47, 4294901760
  %v762 = vsub.f32 %v47, %v761
  %v763 = vand.u32 %v762, 4294901760
  %764 = vmatpush.msra.mxu0 %v763
  %v765 = vand.u32 %v46, 4294901760
  %v766 = vsub.f32 %v46, %v765
  %v767 = vand.u32 %v766, 4294901760
  %768 = vmatpush.msra.mxu0 %v767
  %v769 = vand.u32 %v45, 4294901760
  %v770 = vsub.f32 %v45, %v769
  %v771 = vand.u32 %v770, 4294901760
  %772 = vmatpush.msra.mxu0 %v771
  %v773 = vand.u32 %v44, 4294901760
  %v774 = vsub.f32 %v44, %v773
  %v775 = vand.u32 %v774, 4294901760
  %776 = vmatpush.msra.mxu0 %v775
  %v777 = vand.u32 %v43, 4294901760
  %v778 = vsub.f32 %v43, %v777
  %v779 = vand.u32 %v778, 4294901760
  %780 = vmatpush.msra.mxu0 %v779
  %v781 = vand.u32 %v42, 4294901760
  %v782 = vsub.f32 %v42, %v781
  %v783 = vand.u32 %v782, 4294901760
  %784 = vmatpush.msra.mxu0 %v783
  %v785 = vand.u32 %v41, 4294901760
  %v786 = vsub.f32 %v41, %v785
  %v787 = vand.u32 %v786, 4294901760
  %788 = vmatpush.msra.mxu0 %v787
  %v789 = vand.u32 %v40, 4294901760
  %v790 = vsub.f32 %v40, %v789
  %v791 = vand.u32 %v790, 4294901760
  %792 = vmatpush.msra.mxu0 %v791
  %v793 = vand.u32 %v39, 4294901760
  %v794 = vsub.f32 %v39, %v793
  %v795 = vand.u32 %v794, 4294901760
  %796 = vmatpush.msra.mxu0 %v795
  %v797 = vand.u32 %v38, 4294901760
  %v798 = vsub.f32 %v38, %v797
  %v799 = vand.u32 %v798, 4294901760
  %800 = vmatpush.msra.mxu0 %v799
  %v801 = vand.u32 %v37, 4294901760
  %v802 = vsub.f32 %v37, %v801
  %v803 = vand.u32 %v802, 4294901760
  %804 = vmatpush.msra.mxu0 %v803
  %v805 = vand.u32 %v36, 4294901760
  %v806 = vsub.f32 %v36, %v805
  %v807 = vand.u32 %v806, 4294901760
  %808 = vmatpush.msra.mxu0 %v807
  %v809 = vand.u32 %v35, 4294901760
  %v810 = vsub.f32 %v35, %v809
  %v811 = vand.u32 %v810, 4294901760
  %812 = vmatpush.msra.mxu0 %v811
  %v813 = vand.u32 %v34, 4294901760
  %v814 = vsub.f32 %v34, %v813
  %v815 = vand.u32 %v814, 4294901760
  %816 = vmatpush.msra.mxu0 %v815
  %v817 = vand.u32 %v162, 4294901760
  %818 = vmatmul.f32.gmra.mxu0 %v817
  %v819 = vpop.f32.mrf.mxu0
  %v820 = vadd.f32 %v751, %v819
  %821 = vdwg.mxu0
  %v822 = vand.u32 %v49, 4294901760
  %823 = vmatpush.msra.mxu0 %v822
  %v824 = vand.u32 %v48, 4294901760
  %825 = vmatpush.msra.mxu0 %v824
  %v826 = vand.u32 %v47, 4294901760
  %827 = vmatpush.msra.mxu0 %v826
  %v828 = vand.u32 %v46, 4294901760
  %829 = vmatpush.msra.mxu0 %v828
  %v830 = vand.u32 %v45, 4294901760
  %831 = vmatpush.msra.mxu0 %v830
  %v832 = vand.u32 %v44, 4294901760
  %833 = vmatpush.msra.mxu0 %v832
  %v834 = vand.u32 %v43, 4294901760
  %835 = vmatpush.msra.mxu0 %v834
  %v836 = vand.u32 %v42, 4294901760
  %837 = vmatpush.msra.mxu0 %v836
  %v838 = vand.u32 %v41, 4294901760
  %839 = vmatpush.msra.mxu0 %v838
  %v840 = vand.u32 %v40, 4294901760
  %841 = vmatpush.msra.mxu0 %v840
  %v842 = vand.u32 %v39, 4294901760
  %843 = vmatpush.msra.mxu0 %v842
  %v844 = vand.u32 %v38, 4294901760
  %845 = vmatpush.msra.mxu0 %v844
  %v846 = vand.u32 %v37, 4294901760
  %847 = vmatpush.msra.mxu0 %v846
  %v848 = vand.u32 %v36, 4294901760
  %849 = vmatpush.msra.mxu0 %v848
  %v850 = vand.u32 %v35, 4294901760
  %851 = vmatpush.msra.mxu0 %v850
  %v852 = vand.u32 %v34, 4294901760
  %853 = vmatpush.msra.mxu0 %v852
  %v854 = vand.u32 %v162, 4294901760
  %855 = vmatmul.f32.gmra.mxu0 %v854
  %v856 = vpop.f32.mrf.mxu0
  %v857 = vadd.f32 %v820, %v856
  %858 = vdwg.mxu0
  %v859 = vand.u32 %v65, 4294901760
  %860 = vmatpush.msra.mxu0 %v859
  %v861 = vand.u32 %v64, 4294901760
  %862 = vmatpush.msra.mxu0 %v861
  %v863 = vand.u32 %v63, 4294901760
  %864 = vmatpush.msra.mxu0 %v863
  %v865 = vand.u32 %v62, 4294901760
  %866 = vmatpush.msra.mxu0 %v865
  %v867 = vand.u32 %v61, 4294901760
  %868 = vmatpush.msra.mxu0 %v867
  %v869 = vand.u32 %v60, 4294901760
  %870 = vmatpush.msra.mxu0 %v869
  %v871 = vand.u32 %v59, 4294901760
  %872 = vmatpush.msra.mxu0 %v871
  %v873 = vand.u32 %v58, 4294901760
  %874 = vmatpush.msra.mxu0 %v873
  %v875 = vand.u32 %v57, 4294901760
  %876 = vmatpush.msra.mxu0 %v875
  %v877 = vand.u32 %v56, 4294901760
  %878 = vmatpush.msra.mxu0 %v877
  %v879 = vand.u32 %v55, 4294901760
  %880 = vmatpush.msra.mxu0 %v879
  %v881 = vand.u32 %v54, 4294901760
  %882 = vmatpush.msra.mxu0 %v881
  %v883 = vand.u32 %v53, 4294901760
  %884 = vmatpush.msra.mxu0 %v883
  %v885 = vand.u32 %v52, 4294901760
  %886 = vmatpush.msra.mxu0 %v885
  %v887 = vand.u32 %v51, 4294901760
  %888 = vmatpush.msra.mxu0 %v887
  %v889 = vand.u32 %v50, 4294901760
  %890 = vmatpush.msra.mxu0 %v889
  %v891 = vand.u32 %v163, 4294901760
  %v892 = vsub.f32 %v163, %v891
  %v893 = vand.u32 %v892, 4294901760
  %v894 = vsub.f32 %v892, %v893
  %v895 = vand.u32 %v894, 4294901760
  %896 = vmatmul.f32.gmra.mxu0 %v895
  %v897 = vpop.f32.mrf.mxu0
  %v898 = vadd.f32 %v857, %v897
  %899 = vdwg.mxu0
  %v900 = vand.u32 %v65, 4294901760
  %v901 = vsub.f32 %v65, %v900
  %v902 = vand.u32 %v901, 4294901760
  %v903 = vsub.f32 %v901, %v902
  %v904 = vand.u32 %v903, 4294901760
  %905 = vmatpush.msra.mxu0 %v904
  %v906 = vand.u32 %v64, 4294901760
  %v907 = vsub.f32 %v64, %v906
  %v908 = vand.u32 %v907, 4294901760
  %v909 = vsub.f32 %v907, %v908
  %v910 = vand.u32 %v909, 4294901760
  %911 = vmatpush.msra.mxu0 %v910
  %v912 = vand.u32 %v63, 4294901760
  %v913 = vsub.f32 %v63, %v912
  %v914 = vand.u32 %v913, 4294901760
  %v915 = vsub.f32 %v913, %v914
  %v916 = vand.u32 %v915, 4294901760
  %917 = vmatpush.msra.mxu0 %v916
  %v918 = vand.u32 %v62, 4294901760
  %v919 = vsub.f32 %v62, %v918
  %v920 = vand.u32 %v919, 4294901760
  %v921 = vsub.f32 %v919, %v920
  %v922 = vand.u32 %v921, 4294901760
  %923 = vmatpush.msra.mxu0 %v922
  %v924 = vand.u32 %v61, 4294901760
  %v925 = vsub.f32 %v61, %v924
  %v926 = vand.u32 %v925, 4294901760
  %v927 = vsub.f32 %v925, %v926
  %v928 = vand.u32 %v927, 4294901760
  %929 = vmatpush.msra.mxu0 %v928
  %v930 = vand.u32 %v60, 4294901760
  %v931 = vsub.f32 %v60, %v930
  %v932 = vand.u32 %v931, 4294901760
  %v933 = vsub.f32 %v931, %v932
  %v934 = vand.u32 %v933, 4294901760
  %935 = vmatpush.msra.mxu0 %v934
  %v936 = vand.u32 %v59, 4294901760
  %v937 = vsub.f32 %v59, %v936
  %v938 = vand.u32 %v937, 4294901760
  %v939 = vsub.f32 %v937, %v938
  %v940 = vand.u32 %v939, 4294901760
  %941 = vmatpush.msra.mxu0 %v940
  %v942 = vand.u32 %v58, 4294901760
  %v943 = vsub.f32 %v58, %v942
  %v944 = vand.u32 %v943, 4294901760
  %v945 = vsub.f32 %v943, %v944
  %v946 = vand.u32 %v945, 4294901760
  %947 = vmatpush.msra.mxu0 %v946
  %v948 = vand.u32 %v57, 4294901760
  %v949 = vsub.f32 %v57, %v948
  %v950 = vand.u32 %v949, 4294901760
  %v951 = vsub.f32 %v949, %v950
  %v952 = vand.u32 %v951, 4294901760
  %953 = vmatpush.msra.mxu0 %v952
  %v954 = vand.u32 %v56, 4294901760
  %v955 = vsub.f32 %v56, %v954
  %v956 = vand.u32 %v955, 4294901760
  %v957 = vsub.f32 %v955, %v956
  %v958 = vand.u32 %v957, 4294901760
  %959 = vmatpush.msra.mxu0 %v958
  %v960 = vand.u32 %v55, 4294901760
  %v961 = vsub.f32 %v55, %v960
  %v962 = vand.u32 %v961, 4294901760
  %v963 = vsub.f32 %v961, %v962
  %v964 = vand.u32 %v963, 4294901760
  %965 = vmatpush.msra.mxu0 %v964
  %v966 = vand.u32 %v54, 4294901760
  %v967 = vsub.f32 %v54, %v966
  %v968 = vand.u32 %v967, 4294901760
  %v969 = vsub.f32 %v967, %v968
  %v970 = vand.u32 %v969, 4294901760
  %971 = vmatpush.msra.mxu0 %v970
  %v972 = vand.u32 %v53, 4294901760
  %v973 = vsub.f32 %v53, %v972
  %v974 = vand.u32 %v973, 4294901760
  %v975 = vsub.f32 %v973, %v974
  %v976 = vand.u32 %v975, 4294901760
  %977 = vmatpush.msra.mxu0 %v976
  %v978 = vand.u32 %v52, 4294901760
  %v979 = vsub.f32 %v52, %v978
  %v980 = vand.u32 %v979, 4294901760
  %v981 = vsub.f32 %v979, %v980
  %v982 = vand.u32 %v981, 4294901760
  %983 = vmatpush.msra.mxu0 %v982
  %v984 = vand.u32 %v51, 4294901760
  %v985 = vsub.f32 %v51, %v984
  %v986 = vand.u32 %v985, 4294901760
  %v987 = vsub.f32 %v985, %v986
  %v988 = vand.u32 %v987, 4294901760
  %989 = vmatpush.msra.mxu0 %v988
  %v990 = vand.u32 %v50, 4294901760
  %v991 = vsub.f32 %v50, %v990
  %v992 = vand.u32 %v991, 4294901760
  %v993 = vsub.f32 %v991, %v992
  %v994 = vand.u32 %v993, 4294901760
  %995 = vmatpush.msra.mxu0 %v994
  %v996 = vand.u32 %v163, 4294901760
  %997 = vmatmul.f32.gmra.mxu0 %v996
  %v998 = vpop.f32.mrf.mxu0
  %v999 = vadd.f32 %v898, %v998
  %1000 = vdwg.mxu0
  %v1001 = vand.u32 %v65, 4294901760
  %v1002 = vsub.f32 %v65, %v1001
  %1003 = vmatpush.msra.mxu0 %v1002
  %v1004 = vand.u32 %v64, 4294901760
  %v1005 = vsub.f32 %v64, %v1004
  %1006 = vmatpush.msra.mxu0 %v1005
  %v1007 = vand.u32 %v63, 4294901760
  %v1008 = vsub.f32 %v63, %v1007
  %1009 = vmatpush.msra.mxu0 %v1008
  %v1010 = vand.u32 %v62, 4294901760
  %v1011 = vsub.f32 %v62, %v1010
  %1012 = vmatpush.msra.mxu0 %v1011
  %v1013 = vand.u32 %v61, 4294901760
  %v1014 = vsub.f32 %v61, %v1013
  %1015 = vmatpush.msra.mxu0 %v1014
  %v1016 = vand.u32 %v60, 4294901760
  %v1017 = vsub.f32 %v60, %v1016
  %1018 = vmatpush.msra.mxu0 %v1017
  %v1019 = vand.u32 %v59, 4294901760
  %v1020 = vsub.f32 %v59, %v1019
  %1021 = vmatpush.msra.mxu0 %v1020
  %v1022 = vand.u32 %v58, 4294901760
  %v1023 = vsub.f32 %v58, %v1022
  %1024 = vmatpush.msra.mxu0 %v1023
  %v1025 = vand.u32 %v57, 4294901760
  %v1026 = vsub.f32 %v57, %v1025
  %1027 = vmatpush.msra.mxu0 %v1026
  %v1028 = vand.u32 %v56, 4294901760
  %v1029 = vsub.f32 %v56, %v1028
  %1030 = vmatpush.msra.mxu0 %v1029
  %v1031 = vand.u32 %v55, 4294901760
  %v1032 = vsub.f32 %v55, %v1031
  %1033 = vmatpush.msra.mxu0 %v1032
  %v1034 = vand.u32 %v54, 4294901760
  %v1035 = vsub.f32 %v54, %v1034
  %1036 = vmatpush.msra.mxu0 %v1035
  %v1037 = vand.u32 %v53, 4294901760
  %v1038 = vsub.f32 %v53, %v1037
  %1039 = vmatpush.msra.mxu0 %v1038
  %v1040 = vand.u32 %v52, 4294901760
  %v1041 = vsub.f32 %v52, %v1040
  %1042 = vmatpush.msra.mxu0 %v1041
  %v1043 = vand.u32 %v51, 4294901760
  %v1044 = vsub.f32 %v51, %v1043
  %1045 = vmatpush.msra.mxu0 %v1044
  %v1046 = vand.u32 %v50, 4294901760
  %v1047 = vsub.f32 %v50, %v1046
  %1048 = vmatpush.msra.mxu0 %v1047
  %v1049 = vand.u32 %v163, 4294901760
  %v1050 = vsub.f32 %v163, %v1049
  %1051 = vmatmul.f32.gmra.mxu0 %v1050
  %v1052 = vpop.f32.mrf.mxu0
  %v1053 = vadd.f32 %v999, %v1052
  %1054 = vdwg.mxu0
  %v1055 = vand.u32 %v65, 4294901760
  %1056 = vmatpush.msra.mxu0 %v1055
  %v1057 = vand.u32 %v64, 4294901760
  %1058 = vmatpush.msra.mxu0 %v1057
  %v1059 = vand.u32 %v63, 4294901760
  %1060 = vmatpush.msra.mxu0 %v1059
  %v1061 = vand.u32 %v62, 4294901760
  %1062 = vmatpush.msra.mxu0 %v1061
  %v1063 = vand.u32 %v61, 4294901760
  %1064 = vmatpush.msra.mxu0 %v1063
  %v1065 = vand.u32 %v60, 4294901760
  %1066 = vmatpush.msra.mxu0 %v1065
  %v1067 = vand.u32 %v59, 4294901760
  %1068 = vmatpush.msra.mxu0 %v1067
  %v1069 = vand.u32 %v58, 4294901760
  %1070 = vmatpush.msra.mxu0 %v1069
  %v1071 = vand.u32 %v57, 4294901760
  %1072 = vmatpush.msra.mxu0 %v1071
  %v1073 = vand.u32 %v56, 4294901760
  %1074 = vmatpush.msra.mxu0 %v1073
  %v1075 = vand.u32 %v55, 4294901760
  %1076 = vmatpush.msra.mxu0 %v1075
  %v1077 = vand.u32 %v54, 4294901760
  %1078 = vmatpush.msra.mxu0 %v1077
  %v1079 = vand.u32 %v53, 4294901760
  %1080 = vmatpush.msra.mxu0 %v1079
  %v1081 = vand.u32 %v52, 4294901760
  %1082 = vmatpush.msra.mxu0 %v1081
  %v1083 = vand.u32 %v51, 4294901760
  %1084 = vmatpush.msra.mxu0 %v1083
  %v1085 = vand.u32 %v50, 4294901760
  %1086 = vmatpush.msra.mxu0 %v1085
  %v1087 = vand.u32 %v163, 4294901760
  %v1088 = vsub.f32 %v163, %v1087
  %v1089 = vand.u32 %v1088, 4294901760
  %1090 = vmatmul.f32.gmra.mxu0 %v1089
  %v1091 = vpop.f32.mrf.mxu0
  %v1092 = vadd.f32 %v1053, %v1091
  %1093 = vdwg.mxu0
  %v1094 = vand.u32 %v65, 4294901760
  %v1095 = vsub.f32 %v65, %v1094
  %v1096 = vand.u32 %v1095, 4294901760
  %1097 = vmatpush.msra.mxu0 %v1096
  %v1098 = vand.u32 %v64, 4294901760
  %v1099 = vsub.f32 %v64, %v1098
  %v1100 = vand.u32 %v1099, 4294901760
  %1101 = vmatpush.msra.mxu0 %v1100
  %v1102 = vand.u32 %v63, 4294901760
  %v1103 = vsub.f32 %v63, %v1102
  %v1104 = vand.u32 %v1103, 4294901760
  %1105 = vmatpush.msra.mxu0 %v1104
  %v1106 = vand.u32 %v62, 4294901760
  %v1107 = vsub.f32 %v62, %v1106
  %v1108 = vand.u32 %v1107, 4294901760
  %1109 = vmatpush.msra.mxu0 %v1108
  %v1110 = vand.u32 %v61, 4294901760
  %v1111 = vsub.f32 %v61, %v1110
  %v1112 = vand.u32 %v1111, 4294901760
  %1113 = vmatpush.msra.mxu0 %v1112
  %v1114 = vand.u32 %v60, 4294901760
  %v1115 = vsub.f32 %v60, %v1114
  %v1116 = vand.u32 %v1115, 4294901760
  %1117 = vmatpush.msra.mxu0 %v1116
  %v1118 = vand.u32 %v59, 4294901760
  %v1119 = vsub.f32 %v59, %v1118
  %v1120 = vand.u32 %v1119, 4294901760
  %1121 = vmatpush.msra.mxu0 %v1120
  %v1122 = vand.u32 %v58, 4294901760
  %v1123 = vsub.f32 %v58, %v1122
  %v1124 = vand.u32 %v1123, 4294901760
  %1125 = vmatpush.msra.mxu0 %v1124
  %v1126 = vand.u32 %v57, 4294901760
  %v1127 = vsub.f32 %v57, %v1126
  %v1128 = vand.u32 %v1127, 4294901760
  %1129 = vmatpush.msra.mxu0 %v1128
  %v1130 = vand.u32 %v56, 4294901760
  %v1131 = vsub.f32 %v56, %v1130
  %v1132 = vand.u32 %v1131, 4294901760
  %1133 = vmatpush.msra.mxu0 %v1132
  %v1134 = vand.u32 %v55, 4294901760
  %v1135 = vsub.f32 %v55, %v1134
  %v1136 = vand.u32 %v1135, 4294901760
  %1137 = vmatpush.msra.mxu0 %v1136
  %v1138 = vand.u32 %v54, 4294901760
  %v1139 = vsub.f32 %v54, %v1138
  %v1140 = vand.u32 %v1139, 4294901760
  %1141 = vmatpush.msra.mxu0 %v1140
  %v1142 = vand.u32 %v53, 4294901760
  %v1143 = vsub.f32 %v53, %v1142
  %v1144 = vand.u32 %v1143, 4294901760
  %1145 = vmatpush.msra.mxu0 %v1144
  %v1146 = vand.u32 %v52, 4294901760
  %v1147 = vsub.f32 %v52, %v1146
  %v1148 = vand.u32 %v1147, 4294901760
  %1149 = vmatpush.msra.mxu0 %v1148
  %v1150 = vand.u32 %v51, 4294901760
  %v1151 = vsub.f32 %v51, %v1150
  %v1152 = vand.u32 %v1151, 4294901760
  %1153 = vmatpush.msra.mxu0 %v1152
  %v1154 = vand.u32 %v50, 4294901760
  %v1155 = vsub.f32 %v50, %v1154
  %v1156 = vand.u32 %v1155, 4294901760
  %1157 = vmatpush.msra.mxu0 %v1156
  %v1158 = vand.u32 %v163, 4294901760
  %1159 = vmatmul.f32.gmra.mxu0 %v1158
  %v1160 = vpop.f32.mrf.mxu0
  %v1161 = vadd.f32 %v1092, %v1160
  %1162 = vdwg.mxu0
  %v1163 = vand.u32 %v65, 4294901760
  %1164 = vmatpush.msra.mxu0 %v1163
  %v1165 = vand.u32 %v64, 4294901760
  %1166 = vmatpush.msra.mxu0 %v1165
  %v1167 = vand.u32 %v63, 4294901760
  %1168 = vmatpush.msra.mxu0 %v1167
  %v1169 = vand.u32 %v62, 4294901760
  %1170 = vmatpush.msra.mxu0 %v1169
  %v1171 = vand.u32 %v61, 4294901760
  %1172 = vmatpush.msra.mxu0 %v1171
  %v1173 = vand.u32 %v60, 4294901760
  %1174 = vmatpush.msra.mxu0 %v1173
  %v1175 = vand.u32 %v59, 4294901760
  %1176 = vmatpush.msra.mxu0 %v1175
  %v1177 = vand.u32 %v58, 4294901760
  %1178 = vmatpush.msra.mxu0 %v1177
  %v1179 = vand.u32 %v57, 4294901760
  %1180 = vmatpush.msra.mxu0 %v1179
  %v1181 = vand.u32 %v56, 4294901760
  %1182 = vmatpush.msra.mxu0 %v1181
  %v1183 = vand.u32 %v55, 4294901760
  %1184 = vmatpush.msra.mxu0 %v1183
  %v1185 = vand.u32 %v54, 4294901760
  %1186 = vmatpush.msra.mxu0 %v1185
  %v1187 = vand.u32 %v53, 4294901760
  %1188 = vmatpush.msra.mxu0 %v1187
  %v1189 = vand.u32 %v52, 4294901760
  %1190 = vmatpush.msra.mxu0 %v1189
  %v1191 = vand.u32 %v51, 4294901760
  %1192 = vmatpush.msra.mxu0 %v1191
  %v1193 = vand.u32 %v50, 4294901760
  %1194 = vmatpush.msra.mxu0 %v1193
  %v1195 = vand.u32 %v163, 4294901760
  %1196 = vmatmul.f32.gmra.mxu0 %v1195
  %v1197 = vpop.f32.mrf.mxu0
  %v1198 = vadd.f32 %v1161, %v1197
  %1199 = vdwg.mxu0
  %v1200 = vand.u32 %v81, 4294901760
  %1201 = vmatpush.msra.mxu0 %v1200
  %v1202 = vand.u32 %v80, 4294901760
  %1203 = vmatpush.msra.mxu0 %v1202
  %v1204 = vand.u32 %v79, 4294901760
  %1205 = vmatpush.msra.mxu0 %v1204
  %v1206 = vand.u32 %v78, 4294901760
  %1207 = vmatpush.msra.mxu0 %v1206
  %v1208 = vand.u32 %v77, 4294901760
  %1209 = vmatpush.msra.mxu0 %v1208
  %v1210 = vand.u32 %v76, 4294901760
  %1211 = vmatpush.msra.mxu0 %v1210
  %v1212 = vand.u32 %v75, 4294901760
  %1213 = vmatpush.msra.mxu0 %v1212
  %v1214 = vand.u32 %v74, 4294901760
  %1215 = vmatpush.msra.mxu0 %v1214
  %v1216 = vand.u32 %v73, 4294901760
  %1217 = vmatpush.msra.mxu0 %v1216
  %v1218 = vand.u32 %v72, 4294901760
  %1219 = vmatpush.msra.mxu0 %v1218
  %v1220 = vand.u32 %v71, 4294901760
  %1221 = vmatpush.msra.mxu0 %v1220
  %v1222 = vand.u32 %v70, 4294901760
  %1223 = vmatpush.msra.mxu0 %v1222
  %v1224 = vand.u32 %v69, 4294901760
  %1225 = vmatpush.msra.mxu0 %v1224
  %v1226 = vand.u32 %v68, 4294901760
  %1227 = vmatpush.msra.mxu0 %v1226
  %v1228 = vand.u32 %v67, 4294901760
  %1229 = vmatpush.msra.mxu0 %v1228
  %v1230 = vand.u32 %v66, 4294901760
  %1231 = vmatpush.msra.mxu0 %v1230
  %v1232 = vand.u32 %v164, 4294901760
  %v1233 = vsub.f32 %v164, %v1232
  %v1234 = vand.u32 %v1233, 4294901760
  %v1235 = vsub.f32 %v1233, %v1234
  %v1236 = vand.u32 %v1235, 4294901760
  %1237 = vmatmul.f32.gmra.mxu0 %v1236
  %v1238 = vpop.f32.mrf.mxu0
  %v1239 = vadd.f32 %v1198, %v1238
  %1240 = vdwg.mxu0
  %v1241 = vand.u32 %v81, 4294901760
  %v1242 = vsub.f32 %v81, %v1241
  %v1243 = vand.u32 %v1242, 4294901760
  %v1244 = vsub.f32 %v1242, %v1243
  %v1245 = vand.u32 %v1244, 4294901760
  %1246 = vmatpush.msra.mxu0 %v1245
  %v1247 = vand.u32 %v80, 4294901760
  %v1248 = vsub.f32 %v80, %v1247
  %v1249 = vand.u32 %v1248, 4294901760
  %v1250 = vsub.f32 %v1248, %v1249
  %v1251 = vand.u32 %v1250, 4294901760
  %1252 = vmatpush.msra.mxu0 %v1251
  %v1253 = vand.u32 %v79, 4294901760
  %v1254 = vsub.f32 %v79, %v1253
  %v1255 = vand.u32 %v1254, 4294901760
  %v1256 = vsub.f32 %v1254, %v1255
  %v1257 = vand.u32 %v1256, 4294901760
  %1258 = vmatpush.msra.mxu0 %v1257
  %v1259 = vand.u32 %v78, 4294901760
  %v1260 = vsub.f32 %v78, %v1259
  %v1261 = vand.u32 %v1260, 4294901760
  %v1262 = vsub.f32 %v1260, %v1261
  %v1263 = vand.u32 %v1262, 4294901760
  %1264 = vmatpush.msra.mxu0 %v1263
  %v1265 = vand.u32 %v77, 4294901760
  %v1266 = vsub.f32 %v77, %v1265
  %v1267 = vand.u32 %v1266, 4294901760
  %v1268 = vsub.f32 %v1266, %v1267
  %v1269 = vand.u32 %v1268, 4294901760
  %1270 = vmatpush.msra.mxu0 %v1269
  %v1271 = vand.u32 %v76, 4294901760
  %v1272 = vsub.f32 %v76, %v1271
  %v1273 = vand.u32 %v1272, 4294901760
  %v1274 = vsub.f32 %v1272, %v1273
  %v1275 = vand.u32 %v1274, 4294901760
  %1276 = vmatpush.msra.mxu0 %v1275
  %v1277 = vand.u32 %v75, 4294901760
  %v1278 = vsub.f32 %v75, %v1277
  %v1279 = vand.u32 %v1278, 4294901760
  %v1280 = vsub.f32 %v1278, %v1279
  %v1281 = vand.u32 %v1280, 4294901760
  %1282 = vmatpush.msra.mxu0 %v1281
  %v1283 = vand.u32 %v74, 4294901760
  %v1284 = vsub.f32 %v74, %v1283
  %v1285 = vand.u32 %v1284, 4294901760
  %v1286 = vsub.f32 %v1284, %v1285
  %v1287 = vand.u32 %v1286, 4294901760
  %1288 = vmatpush.msra.mxu0 %v1287
  %v1289 = vand.u32 %v73, 4294901760
  %v1290 = vsub.f32 %v73, %v1289
  %v1291 = vand.u32 %v1290, 4294901760
  %v1292 = vsub.f32 %v1290, %v1291
  %v1293 = vand.u32 %v1292, 4294901760
  %1294 = vmatpush.msra.mxu0 %v1293
  %v1295 = vand.u32 %v72, 4294901760
  %v1296 = vsub.f32 %v72, %v1295
  %v1297 = vand.u32 %v1296, 4294901760
  %v1298 = vsub.f32 %v1296, %v1297
  %v1299 = vand.u32 %v1298, 4294901760
  %1300 = vmatpush.msra.mxu0 %v1299
  %v1301 = vand.u32 %v71, 4294901760
  %v1302 = vsub.f32 %v71, %v1301
  %v1303 = vand.u32 %v1302, 4294901760
  %v1304 = vsub.f32 %v1302, %v1303
  %v1305 = vand.u32 %v1304, 4294901760
  %1306 = vmatpush.msra.mxu0 %v1305
  %v1307 = vand.u32 %v70, 4294901760
  %v1308 = vsub.f32 %v70, %v1307
  %v1309 = vand.u32 %v1308, 4294901760
  %v1310 = vsub.f32 %v1308, %v1309
  %v1311 = vand.u32 %v1310, 4294901760
  %1312 = vmatpush.msra.mxu0 %v1311
  %v1313 = vand.u32 %v69, 4294901760
  %v1314 = vsub.f32 %v69, %v1313
  %v1315 = vand.u32 %v1314, 4294901760
  %v1316 = vsub.f32 %v1314, %v1315
  %v1317 = vand.u32 %v1316, 4294901760
  %1318 = vmatpush.msra.mxu0 %v1317
  %v1319 = vand.u32 %v68, 4294901760
  %v1320 = vsub.f32 %v68, %v1319
  %v1321 = vand.u32 %v1320, 4294901760
  %v1322 = vsub.f32 %v1320, %v1321
  %v1323 = vand.u32 %v1322, 4294901760
  %1324 = vmatpush.msra.mxu0 %v1323
  %v1325 = vand.u32 %v67, 4294901760
  %v1326 = vsub.f32 %v67, %v1325
  %v1327 = vand.u32 %v1326, 4294901760
  %v1328 = vsub.f32 %v1326, %v1327
  %v1329 = vand.u32 %v1328, 4294901760
  %1330 = vmatpush.msra.mxu0 %v1329
  %v1331 = vand.u32 %v66, 4294901760
  %v1332 = vsub.f32 %v66, %v1331
  %v1333 = vand.u32 %v1332, 4294901760
  %v1334 = vsub.f32 %v1332, %v1333
  %v1335 = vand.u32 %v1334, 4294901760
  %1336 = vmatpush.msra.mxu0 %v1335
  %v1337 = vand.u32 %v164, 4294901760
  %1338 = vmatmul.f32.gmra.mxu0 %v1337
  %v1339 = vpop.f32.mrf.mxu0
  %v1340 = vadd.f32 %v1239, %v1339
  %1341 = vdwg.mxu0
  %v1342 = vand.u32 %v81, 4294901760
  %v1343 = vsub.f32 %v81, %v1342
  %1344 = vmatpush.msra.mxu0 %v1343
  %v1345 = vand.u32 %v80, 4294901760
  %v1346 = vsub.f32 %v80, %v1345
  %1347 = vmatpush.msra.mxu0 %v1346
  %v1348 = vand.u32 %v79, 4294901760
  %v1349 = vsub.f32 %v79, %v1348
  %1350 = vmatpush.msra.mxu0 %v1349
  %v1351 = vand.u32 %v78, 4294901760
  %v1352 = vsub.f32 %v78, %v1351
  %1353 = vmatpush.msra.mxu0 %v1352
  %v1354 = vand.u32 %v77, 4294901760
  %v1355 = vsub.f32 %v77, %v1354
  %1356 = vmatpush.msra.mxu0 %v1355
  %v1357 = vand.u32 %v76, 4294901760
  %v1358 = vsub.f32 %v76, %v1357
  %1359 = vmatpush.msra.mxu0 %v1358
  %v1360 = vand.u32 %v75, 4294901760
  %v1361 = vsub.f32 %v75, %v1360
  %1362 = vmatpush.msra.mxu0 %v1361
  %v1363 = vand.u32 %v74, 4294901760
  %v1364 = vsub.f32 %v74, %v1363
  %1365 = vmatpush.msra.mxu0 %v1364
  %v1366 = vand.u32 %v73, 4294901760
  %v1367 = vsub.f32 %v73, %v1366
  %1368 = vmatpush.msra.mxu0 %v1367
  %v1369 = vand.u32 %v72, 4294901760
  %v1370 = vsub.f32 %v72, %v1369
  %1371 = vmatpush.msra.mxu0 %v1370
  %v1372 = vand.u32 %v71, 4294901760
  %v1373 = vsub.f32 %v71, %v1372
  %1374 = vmatpush.msra.mxu0 %v1373
  %v1375 = vand.u32 %v70, 4294901760
  %v1376 = vsub.f32 %v70, %v1375
  %1377 = vmatpush.msra.mxu0 %v1376
  %v1378 = vand.u32 %v69, 4294901760
  %v1379 = vsub.f32 %v69, %v1378
  %1380 = vmatpush.msra.mxu0 %v1379
  %v1381 = vand.u32 %v68, 4294901760
  %v1382 = vsub.f32 %v68, %v1381
  %1383 = vmatpush.msra.mxu0 %v1382
  %v1384 = vand.u32 %v67, 4294901760
  %v1385 = vsub.f32 %v67, %v1384
  %1386 = vmatpush.msra.mxu0 %v1385
  %v1387 = vand.u32 %v66, 4294901760
  %v1388 = vsub.f32 %v66, %v1387
  %1389 = vmatpush.msra.mxu0 %v1388
  %v1390 = vand.u32 %v164, 4294901760
  %v1391 = vsub.f32 %v164, %v1390
  %1392 = vmatmul.f32.gmra.mxu0 %v1391
  %v1393 = vpop.f32.mrf.mxu0
  %v1394 = vadd.f32 %v1340, %v1393
  %1395 = vdwg.mxu0
  %v1396 = vand.u32 %v81, 4294901760
  %1397 = vmatpush.msra.mxu0 %v1396
  %v1398 = vand.u32 %v80, 4294901760
  %1399 = vmatpush.msra.mxu0 %v1398
  %v1400 = vand.u32 %v79, 4294901760
  %1401 = vmatpush.msra.mxu0 %v1400
  %v1402 = vand.u32 %v78, 4294901760
  %1403 = vmatpush.msra.mxu0 %v1402
  %v1404 = vand.u32 %v77, 4294901760
  %1405 = vmatpush.msra.mxu0 %v1404
  %v1406 = vand.u32 %v76, 4294901760
  %1407 = vmatpush.msra.mxu0 %v1406
  %v1408 = vand.u32 %v75, 4294901760
  %1409 = vmatpush.msra.mxu0 %v1408
  %v1410 = vand.u32 %v74, 4294901760
  %1411 = vmatpush.msra.mxu0 %v1410
  %v1412 = vand.u32 %v73, 4294901760
  %1413 = vmatpush.msra.mxu0 %v1412
  %v1414 = vand.u32 %v72, 4294901760
  %1415 = vmatpush.msra.mxu0 %v1414
  %v1416 = vand.u32 %v71, 4294901760
  %1417 = vmatpush.msra.mxu0 %v1416
  %v1418 = vand.u32 %v70, 4294901760
  %1419 = vmatpush.msra.mxu0 %v1418
  %v1420 = vand.u32 %v69, 4294901760
  %1421 = vmatpush.msra.mxu0 %v1420
  %v1422 = vand.u32 %v68, 4294901760
  %1423 = vmatpush.msra.mxu0 %v1422
  %v1424 = vand.u32 %v67, 4294901760
  %1425 = vmatpush.msra.mxu0 %v1424
  %v1426 = vand.u32 %v66, 4294901760
  %1427 = vmatpush.msra.mxu0 %v1426
  %v1428 = vand.u32 %v164, 4294901760
  %v1429 = vsub.f32 %v164, %v1428
  %v1430 = vand.u32 %v1429, 4294901760
  %1431 = vmatmul.f32.gmra.mxu0 %v1430
  %v1432 = vpop.f32.mrf.mxu0
  %v1433 = vadd.f32 %v1394, %v1432
  %1434 = vdwg.mxu0
  %v1435 = vand.u32 %v81, 4294901760
  %v1436 = vsub.f32 %v81, %v1435
  %v1437 = vand.u32 %v1436, 4294901760
  %1438 = vmatpush.msra.mxu0 %v1437
  %v1439 = vand.u32 %v80, 4294901760
  %v1440 = vsub.f32 %v80, %v1439
  %v1441 = vand.u32 %v1440, 4294901760
  %1442 = vmatpush.msra.mxu0 %v1441
  %v1443 = vand.u32 %v79, 4294901760
  %v1444 = vsub.f32 %v79, %v1443
  %v1445 = vand.u32 %v1444, 4294901760
  %1446 = vmatpush.msra.mxu0 %v1445
  %v1447 = vand.u32 %v78, 4294901760
  %v1448 = vsub.f32 %v78, %v1447
  %v1449 = vand.u32 %v1448, 4294901760
  %1450 = vmatpush.msra.mxu0 %v1449
  %v1451 = vand.u32 %v77, 4294901760
  %v1452 = vsub.f32 %v77, %v1451
  %v1453 = vand.u32 %v1452, 4294901760
  %1454 = vmatpush.msra.mxu0 %v1453
  %v1455 = vand.u32 %v76, 4294901760
  %v1456 = vsub.f32 %v76, %v1455
  %v1457 = vand.u32 %v1456, 4294901760
  %1458 = vmatpush.msra.mxu0 %v1457
  %v1459 = vand.u32 %v75, 4294901760
  %v1460 = vsub.f32 %v75, %v1459
  %v1461 = vand.u32 %v1460, 4294901760
  %1462 = vmatpush.msra.mxu0 %v1461
  %v1463 = vand.u32 %v74, 4294901760
  %v1464 = vsub.f32 %v74, %v1463
  %v1465 = vand.u32 %v1464, 4294901760
  %1466 = vmatpush.msra.mxu0 %v1465
  %v1467 = vand.u32 %v73, 4294901760
  %v1468 = vsub.f32 %v73, %v1467
  %v1469 = vand.u32 %v1468, 4294901760
  %1470 = vmatpush.msra.mxu0 %v1469
  %v1471 = vand.u32 %v72, 4294901760
  %v1472 = vsub.f32 %v72, %v1471
  %v1473 = vand.u32 %v1472, 4294901760
  %1474 = vmatpush.msra.mxu0 %v1473
  %v1475 = vand.u32 %v71, 4294901760
  %v1476 = vsub.f32 %v71, %v1475
  %v1477 = vand.u32 %v1476, 4294901760
  %1478 = vmatpush.msra.mxu0 %v1477
  %v1479 = vand.u32 %v70, 4294901760
  %v1480 = vsub.f32 %v70, %v1479
  %v1481 = vand.u32 %v1480, 4294901760
  %1482 = vmatpush.msra.mxu0 %v1481
  %v1483 = vand.u32 %v69, 4294901760
  %v1484 = vsub.f32 %v69, %v1483
  %v1485 = vand.u32 %v1484, 4294901760
  %1486 = vmatpush.msra.mxu0 %v1485
  %v1487 = vand.u32 %v68, 4294901760
  %v1488 = vsub.f32 %v68, %v1487
  %v1489 = vand.u32 %v1488, 4294901760
  %1490 = vmatpush.msra.mxu0 %v1489
  %v1491 = vand.u32 %v67, 4294901760
  %v1492 = vsub.f32 %v67, %v1491
  %v1493 = vand.u32 %v1492, 4294901760
  %1494 = vmatpush.msra.mxu0 %v1493
  %v1495 = vand.u32 %v66, 4294901760
  %v1496 = vsub.f32 %v66, %v1495
  %v1497 = vand.u32 %v1496, 4294901760
  %1498 = vmatpush.msra.mxu0 %v1497
  %v1499 = vand.u32 %v164, 4294901760
  %1500 = vmatmul.f32.gmra.mxu0 %v1499
  %v1501 = vpop.f32.mrf.mxu0
  %v1502 = vadd.f32 %v1433, %v1501
  %1503 = vdwg.mxu0
  %v1504 = vand.u32 %v81, 4294901760
  %1505 = vmatpush.msra.mxu0 %v1504
  %v1506 = vand.u32 %v80, 4294901760
  %1507 = vmatpush.msra.mxu0 %v1506
  %v1508 = vand.u32 %v79, 4294901760
  %1509 = vmatpush.msra.mxu0 %v1508
  %v1510 = vand.u32 %v78, 4294901760
  %1511 = vmatpush.msra.mxu0 %v1510
  %v1512 = vand.u32 %v77, 4294901760
  %1513 = vmatpush.msra.mxu0 %v1512
  %v1514 = vand.u32 %v76, 4294901760
  %1515 = vmatpush.msra.mxu0 %v1514
  %v1516 = vand.u32 %v75, 4294901760
  %1517 = vmatpush.msra.mxu0 %v1516
  %v1518 = vand.u32 %v74, 4294901760
  %1519 = vmatpush.msra.mxu0 %v1518
  %v1520 = vand.u32 %v73, 4294901760
  %1521 = vmatpush.msra.mxu0 %v1520
  %v1522 = vand.u32 %v72, 4294901760
  %1523 = vmatpush.msra.mxu0 %v1522
  %v1524 = vand.u32 %v71, 4294901760
  %1525 = vmatpush.msra.mxu0 %v1524
  %v1526 = vand.u32 %v70, 4294901760
  %1527 = vmatpush.msra.mxu0 %v1526
  %v1528 = vand.u32 %v69, 4294901760
  %1529 = vmatpush.msra.mxu0 %v1528
  %v1530 = vand.u32 %v68, 4294901760
  %1531 = vmatpush.msra.mxu0 %v1530
  %v1532 = vand.u32 %v67, 4294901760
  %1533 = vmatpush.msra.mxu0 %v1532
  %v1534 = vand.u32 %v66, 4294901760
  %1535 = vmatpush.msra.mxu0 %v1534
  %v1536 = vand.u32 %v164, 4294901760
  %1537 = vmatmul.f32.gmra.mxu0 %v1536
  %v1538 = vpop.f32.mrf.mxu0
  %v1539 = vadd.f32 %v1502, %v1538
  %1540 = vdwg.mxu0
  %v1541 = vand.u32 %v97, 4294901760
  %1542 = vmatpush.msra.mxu0 %v1541
  %v1543 = vand.u32 %v96, 4294901760
  %1544 = vmatpush.msra.mxu0 %v1543
  %v1545 = vand.u32 %v95, 4294901760
  %1546 = vmatpush.msra.mxu0 %v1545
  %v1547 = vand.u32 %v94, 4294901760
  %1548 = vmatpush.msra.mxu0 %v1547
  %v1549 = vand.u32 %v93, 4294901760
  %1550 = vmatpush.msra.mxu0 %v1549
  %v1551 = vand.u32 %v92, 4294901760
  %1552 = vmatpush.msra.mxu0 %v1551
  %v1553 = vand.u32 %v91, 4294901760
  %1554 = vmatpush.msra.mxu0 %v1553
  %v1555 = vand.u32 %v90, 4294901760
  %1556 = vmatpush.msra.mxu0 %v1555
  %v1557 = vand.u32 %v89, 4294901760
  %1558 = vmatpush.msra.mxu0 %v1557
  %v1559 = vand.u32 %v88, 4294901760
  %1560 = vmatpush.msra.mxu0 %v1559
  %v1561 = vand.u32 %v87, 4294901760
  %1562 = vmatpush.msra.mxu0 %v1561
  %v1563 = vand.u32 %v86, 4294901760
  %1564 = vmatpush.msra.mxu0 %v1563
  %v1565 = vand.u32 %v85, 4294901760
  %1566 = vmatpush.msra.mxu0 %v1565
  %v1567 = vand.u32 %v84, 4294901760
  %1568 = vmatpush.msra.mxu0 %v1567
  %v1569 = vand.u32 %v83, 4294901760
  %1570 = vmatpush.msra.mxu0 %v1569
  %v1571 = vand.u32 %v82, 4294901760
  %1572 = vmatpush.msra.mxu0 %v1571
  %v1573 = vand.u32 %v165, 4294901760
  %v1574 = vsub.f32 %v165, %v1573
  %v1575 = vand.u32 %v1574, 4294901760
  %v1576 = vsub.f32 %v1574, %v1575
  %v1577 = vand.u32 %v1576, 4294901760
  %1578 = vmatmul.f32.gmra.mxu0 %v1577
  %v1579 = vpop.f32.mrf.mxu0
  %v1580 = vadd.f32 %v1539, %v1579
  %1581 = vdwg.mxu0
  %v1582 = vand.u32 %v97, 4294901760
  %v1583 = vsub.f32 %v97, %v1582
  %v1584 = vand.u32 %v1583, 4294901760
  %v1585 = vsub.f32 %v1583, %v1584
  %v1586 = vand.u32 %v1585, 4294901760
  %1587 = vmatpush.msra.mxu0 %v1586
  %v1588 = vand.u32 %v96, 4294901760
  %v1589 = vsub.f32 %v96, %v1588
  %v1590 = vand.u32 %v1589, 4294901760
  %v1591 = vsub.f32 %v1589, %v1590
  %v1592 = vand.u32 %v1591, 4294901760
  %1593 = vmatpush.msra.mxu0 %v1592
  %v1594 = vand.u32 %v95, 4294901760
  %v1595 = vsub.f32 %v95, %v1594
  %v1596 = vand.u32 %v1595, 4294901760
  %v1597 = vsub.f32 %v1595, %v1596
  %v1598 = vand.u32 %v1597, 4294901760
  %1599 = vmatpush.msra.mxu0 %v1598
  %v1600 = vand.u32 %v94, 4294901760
  %v1601 = vsub.f32 %v94, %v1600
  %v1602 = vand.u32 %v1601, 4294901760
  %v1603 = vsub.f32 %v1601, %v1602
  %v1604 = vand.u32 %v1603, 4294901760
  %1605 = vmatpush.msra.mxu0 %v1604
  %v1606 = vand.u32 %v93, 4294901760
  %v1607 = vsub.f32 %v93, %v1606
  %v1608 = vand.u32 %v1607, 4294901760
  %v1609 = vsub.f32 %v1607, %v1608
  %v1610 = vand.u32 %v1609, 4294901760
  %1611 = vmatpush.msra.mxu0 %v1610
  %v1612 = vand.u32 %v92, 4294901760
  %v1613 = vsub.f32 %v92, %v1612
  %v1614 = vand.u32 %v1613, 4294901760
  %v1615 = vsub.f32 %v1613, %v1614
  %v1616 = vand.u32 %v1615, 4294901760
  %1617 = vmatpush.msra.mxu0 %v1616
  %v1618 = vand.u32 %v91, 4294901760
  %v1619 = vsub.f32 %v91, %v1618
  %v1620 = vand.u32 %v1619, 4294901760
  %v1621 = vsub.f32 %v1619, %v1620
  %v1622 = vand.u32 %v1621, 4294901760
  %1623 = vmatpush.msra.mxu0 %v1622
  %v1624 = vand.u32 %v90, 4294901760
  %v1625 = vsub.f32 %v90, %v1624
  %v1626 = vand.u32 %v1625, 4294901760
  %v1627 = vsub.f32 %v1625, %v1626
  %v1628 = vand.u32 %v1627, 4294901760
  %1629 = vmatpush.msra.mxu0 %v1628
  %v1630 = vand.u32 %v89, 4294901760
  %v1631 = vsub.f32 %v89, %v1630
  %v1632 = vand.u32 %v1631, 4294901760
  %v1633 = vsub.f32 %v1631, %v1632
  %v1634 = vand.u32 %v1633, 4294901760
  %1635 = vmatpush.msra.mxu0 %v1634
  %v1636 = vand.u32 %v88, 4294901760
  %v1637 = vsub.f32 %v88, %v1636
  %v1638 = vand.u32 %v1637, 4294901760
  %v1639 = vsub.f32 %v1637, %v1638
  %v1640 = vand.u32 %v1639, 4294901760
  %1641 = vmatpush.msra.mxu0 %v1640
  %v1642 = vand.u32 %v87, 4294901760
  %v1643 = vsub.f32 %v87, %v1642
  %v1644 = vand.u32 %v1643, 4294901760
  %v1645 = vsub.f32 %v1643, %v1644
  %v1646 = vand.u32 %v1645, 4294901760
  %1647 = vmatpush.msra.mxu0 %v1646
  %v1648 = vand.u32 %v86, 4294901760
  %v1649 = vsub.f32 %v86, %v1648
  %v1650 = vand.u32 %v1649, 4294901760
  %v1651 = vsub.f32 %v1649, %v1650
  %v1652 = vand.u32 %v1651, 4294901760
  %1653 = vmatpush.msra.mxu0 %v1652
  %v1654 = vand.u32 %v85, 4294901760
  %v1655 = vsub.f32 %v85, %v1654
  %v1656 = vand.u32 %v1655, 4294901760
  %v1657 = vsub.f32 %v1655, %v1656
  %v1658 = vand.u32 %v1657, 4294901760
  %1659 = vmatpush.msra.mxu0 %v1658
  %v1660 = vand.u32 %v84, 4294901760
  %v1661 = vsub.f32 %v84, %v1660
  %v1662 = vand.u32 %v1661, 4294901760
  %v1663 = vsub.f32 %v1661, %v1662
  %v1664 = vand.u32 %v1663, 4294901760
  %1665 = vmatpush.msra.mxu0 %v1664
  %v1666 = vand.u32 %v83, 4294901760
  %v1667 = vsub.f32 %v83, %v1666
  %v1668 = vand.u32 %v1667, 4294901760
  %v1669 = vsub.f32 %v1667, %v1668
  %v1670 = vand.u32 %v1669, 4294901760
  %1671 = vmatpush.msra.mxu0 %v1670
  %v1672 = vand.u32 %v82, 4294901760
  %v1673 = vsub.f32 %v82, %v1672
  %v1674 = vand.u32 %v1673, 4294901760
  %v1675 = vsub.f32 %v1673, %v1674
  %v1676 = vand.u32 %v1675, 4294901760
  %1677 = vmatpush.msra.mxu0 %v1676
  %v1678 = vand.u32 %v165, 4294901760
  %1679 = vmatmul.f32.gmra.mxu0 %v1678
  %v1680 = vpop.f32.mrf.mxu0
  %v1681 = vadd.f32 %v1580, %v1680
  %1682 = vdwg.mxu0
  %v1683 = vand.u32 %v97, 4294901760
  %v1684 = vsub.f32 %v97, %v1683
  %1685 = vmatpush.msra.mxu0 %v1684
  %v1686 = vand.u32 %v96, 4294901760
  %v1687 = vsub.f32 %v96, %v1686
  %1688 = vmatpush.msra.mxu0 %v1687
  %v1689 = vand.u32 %v95, 4294901760
  %v1690 = vsub.f32 %v95, %v1689
  %1691 = vmatpush.msra.mxu0 %v1690
  %v1692 = vand.u32 %v94, 4294901760
  %v1693 = vsub.f32 %v94, %v1692
  %1694 = vmatpush.msra.mxu0 %v1693
  %v1695 = vand.u32 %v93, 4294901760
  %v1696 = vsub.f32 %v93, %v1695
  %1697 = vmatpush.msra.mxu0 %v1696
  %v1698 = vand.u32 %v92, 4294901760
  %v1699 = vsub.f32 %v92, %v1698
  %1700 = vmatpush.msra.mxu0 %v1699
  %v1701 = vand.u32 %v91, 4294901760
  %v1702 = vsub.f32 %v91, %v1701
  %1703 = vmatpush.msra.mxu0 %v1702
  %v1704 = vand.u32 %v90, 4294901760
  %v1705 = vsub.f32 %v90, %v1704
  %1706 = vmatpush.msra.mxu0 %v1705
  %v1707 = vand.u32 %v89, 4294901760
  %v1708 = vsub.f32 %v89, %v1707
  %1709 = vmatpush.msra.mxu0 %v1708
  %v1710 = vand.u32 %v88, 4294901760
  %v1711 = vsub.f32 %v88, %v1710
  %1712 = vmatpush.msra.mxu0 %v1711
  %v1713 = vand.u32 %v87, 4294901760
  %v1714 = vsub.f32 %v87, %v1713
  %1715 = vmatpush.msra.mxu0 %v1714
  %v1716 = vand.u32 %v86, 4294901760
  %v1717 = vsub.f32 %v86, %v1716
  %1718 = vmatpush.msra.mxu0 %v1717
  %v1719 = vand.u32 %v85, 4294901760
  %v1720 = vsub.f32 %v85, %v1719
  %1721 = vmatpush.msra.mxu0 %v1720
  %v1722 = vand.u32 %v84, 4294901760
  %v1723 = vsub.f32 %v84, %v1722
  %1724 = vmatpush.msra.mxu0 %v1723
  %v1725 = vand.u32 %v83, 4294901760
  %v1726 = vsub.f32 %v83, %v1725
  %1727 = vmatpush.msra.mxu0 %v1726
  %v1728 = vand.u32 %v82, 4294901760
  %v1729 = vsub.f32 %v82, %v1728
  %1730 = vmatpush.msra.mxu0 %v1729
  %v1731 = vand.u32 %v165, 4294901760
  %v1732 = vsub.f32 %v165, %v1731
  %1733 = vmatmul.f32.gmra.mxu0 %v1732
  %v1734 = vpop.f32.mrf.mxu0
  %v1735 = vadd.f32 %v1681, %v1734
  %1736 = vdwg.mxu0
  %v1737 = vand.u32 %v97, 4294901760
  %1738 = vmatpush.msra.mxu0 %v1737
  %v1739 = vand.u32 %v96, 4294901760
  %1740 = vmatpush.msra.mxu0 %v1739
  %v1741 = vand.u32 %v95, 4294901760
  %1742 = vmatpush.msra.mxu0 %v1741
  %v1743 = vand.u32 %v94, 4294901760
  %1744 = vmatpush.msra.mxu0 %v1743
  %v1745 = vand.u32 %v93, 4294901760
  %1746 = vmatpush.msra.mxu0 %v1745
  %v1747 = vand.u32 %v92, 4294901760
  %1748 = vmatpush.msra.mxu0 %v1747
  %v1749 = vand.u32 %v91, 4294901760
  %1750 = vmatpush.msra.mxu0 %v1749
  %v1751 = vand.u32 %v90, 4294901760
  %1752 = vmatpush.msra.mxu0 %v1751
  %v1753 = vand.u32 %v89, 4294901760
  %1754 = vmatpush.msra.mxu0 %v1753
  %v1755 = vand.u32 %v88, 4294901760
  %1756 = vmatpush.msra.mxu0 %v1755
  %v1757 = vand.u32 %v87, 4294901760
  %1758 = vmatpush.msra.mxu0 %v1757
  %v1759 = vand.u32 %v86, 4294901760
  %1760 = vmatpush.msra.mxu0 %v1759
  %v1761 = vand.u32 %v85, 4294901760
  %1762 = vmatpush.msra.mxu0 %v1761
  %v1763 = vand.u32 %v84, 4294901760
  %1764 = vmatpush.msra.mxu0 %v1763
  %v1765 = vand.u32 %v83, 4294901760
  %1766 = vmatpush.msra.mxu0 %v1765
  %v1767 = vand.u32 %v82, 4294901760
  %1768 = vmatpush.msra.mxu0 %v1767
  %v1769 = vand.u32 %v165, 4294901760
  %v1770 = vsub.f32 %v165, %v1769
  %v1771 = vand.u32 %v1770, 4294901760
  %1772 = vmatmul.f32.gmra.mxu0 %v1771
  %v1773 = vpop.f32.mrf.mxu0
  %v1774 = vadd.f32 %v1735, %v1773
  %1775 = vdwg.mxu0
  %v1776 = vand.u32 %v97, 4294901760
  %v1777 = vsub.f32 %v97, %v1776
  %v1778 = vand.u32 %v1777, 4294901760
  %1779 = vmatpush.msra.mxu0 %v1778
  %v1780 = vand.u32 %v96, 4294901760
  %v1781 = vsub.f32 %v96, %v1780
  %v1782 = vand.u32 %v1781, 4294901760
  %1783 = vmatpush.msra.mxu0 %v1782
  %v1784 = vand.u32 %v95, 4294901760
  %v1785 = vsub.f32 %v95, %v1784
  %v1786 = vand.u32 %v1785, 4294901760
  %1787 = vmatpush.msra.mxu0 %v1786
  %v1788 = vand.u32 %v94, 4294901760
  %v1789 = vsub.f32 %v94, %v1788
  %v1790 = vand.u32 %v1789, 4294901760
  %1791 = vmatpush.msra.mxu0 %v1790
  %v1792 = vand.u32 %v93, 4294901760
  %v1793 = vsub.f32 %v93, %v1792
  %v1794 = vand.u32 %v1793, 4294901760
  %1795 = vmatpush.msra.mxu0 %v1794
  %v1796 = vand.u32 %v92, 4294901760
  %v1797 = vsub.f32 %v92, %v1796
  %v1798 = vand.u32 %v1797, 4294901760
  %1799 = vmatpush.msra.mxu0 %v1798
  %v1800 = vand.u32 %v91, 4294901760
  %v1801 = vsub.f32 %v91, %v1800
  %v1802 = vand.u32 %v1801, 4294901760
  %1803 = vmatpush.msra.mxu0 %v1802
  %v1804 = vand.u32 %v90, 4294901760
  %v1805 = vsub.f32 %v90, %v1804
  %v1806 = vand.u32 %v1805, 4294901760
  %1807 = vmatpush.msra.mxu0 %v1806
  %v1808 = vand.u32 %v89, 4294901760
  %v1809 = vsub.f32 %v89, %v1808
  %v1810 = vand.u32 %v1809, 4294901760
  %1811 = vmatpush.msra.mxu0 %v1810
  %v1812 = vand.u32 %v88, 4294901760
  %v1813 = vsub.f32 %v88, %v1812
  %v1814 = vand.u32 %v1813, 4294901760
  %1815 = vmatpush.msra.mxu0 %v1814
  %v1816 = vand.u32 %v87, 4294901760
  %v1817 = vsub.f32 %v87, %v1816
  %v1818 = vand.u32 %v1817, 4294901760
  %1819 = vmatpush.msra.mxu0 %v1818
  %v1820 = vand.u32 %v86, 4294901760
  %v1821 = vsub.f32 %v86, %v1820
  %v1822 = vand.u32 %v1821, 4294901760
  %1823 = vmatpush.msra.mxu0 %v1822
  %v1824 = vand.u32 %v85, 4294901760
  %v1825 = vsub.f32 %v85, %v1824
  %v1826 = vand.u32 %v1825, 4294901760
  %1827 = vmatpush.msra.mxu0 %v1826
  %v1828 = vand.u32 %v84, 4294901760
  %v1829 = vsub.f32 %v84, %v1828
  %v1830 = vand.u32 %v1829, 4294901760
  %1831 = vmatpush.msra.mxu0 %v1830
  %v1832 = vand.u32 %v83, 4294901760
  %v1833 = vsub.f32 %v83, %v1832
  %v1834 = vand.u32 %v1833, 4294901760
  %1835 = vmatpush.msra.mxu0 %v1834
  %v1836 = vand.u32 %v82, 4294901760
  %v1837 = vsub.f32 %v82, %v1836
  %v1838 = vand.u32 %v1837, 4294901760
  %1839 = vmatpush.msra.mxu0 %v1838
  %v1840 = vand.u32 %v165, 4294901760
  %1841 = vmatmul.f32.gmra.mxu0 %v1840
  %v1842 = vpop.f32.mrf.mxu0
  %v1843 = vadd.f32 %v1774, %v1842
  %1844 = vdwg.mxu0
  %v1845 = vand.u32 %v97, 4294901760
  %1846 = vmatpush.msra.mxu0 %v1845
  %v1847 = vand.u32 %v96, 4294901760
  %1848 = vmatpush.msra.mxu0 %v1847
  %v1849 = vand.u32 %v95, 4294901760
  %1850 = vmatpush.msra.mxu0 %v1849
  %v1851 = vand.u32 %v94, 4294901760
  %1852 = vmatpush.msra.mxu0 %v1851
  %v1853 = vand.u32 %v93, 4294901760
  %1854 = vmatpush.msra.mxu0 %v1853
  %v1855 = vand.u32 %v92, 4294901760
  %1856 = vmatpush.msra.mxu0 %v1855
  %v1857 = vand.u32 %v91, 4294901760
  %1858 = vmatpush.msra.mxu0 %v1857
  %v1859 = vand.u32 %v90, 4294901760
  %1860 = vmatpush.msra.mxu0 %v1859
  %v1861 = vand.u32 %v89, 4294901760
  %1862 = vmatpush.msra.mxu0 %v1861
  %v1863 = vand.u32 %v88, 4294901760
  %1864 = vmatpush.msra.mxu0 %v1863
  %v1865 = vand.u32 %v87, 4294901760
  %1866 = vmatpush.msra.mxu0 %v1865
  %v1867 = vand.u32 %v86, 4294901760
  %1868 = vmatpush.msra.mxu0 %v1867
  %v1869 = vand.u32 %v85, 4294901760
  %1870 = vmatpush.msra.mxu0 %v1869
  %v1871 = vand.u32 %v84, 4294901760
  %1872 = vmatpush.msra.mxu0 %v1871
  %v1873 = vand.u32 %v83, 4294901760
  %1874 = vmatpush.msra.mxu0 %v1873
  %v1875 = vand.u32 %v82, 4294901760
  %1876 = vmatpush.msra.mxu0 %v1875
  %v1877 = vand.u32 %v165, 4294901760
  %1878 = vmatmul.f32.gmra.mxu0 %v1877
  %v1879 = vpop.f32.mrf.mxu0
  %v1880 = vadd.f32 %v1843, %v1879
  %1881 = vdwg.mxu0
  %v1882 = vand.u32 %v113, 4294901760
  %1883 = vmatpush.msra.mxu0 %v1882
  %v1884 = vand.u32 %v112, 4294901760
  %1885 = vmatpush.msra.mxu0 %v1884
  %v1886 = vand.u32 %v111, 4294901760
  %1887 = vmatpush.msra.mxu0 %v1886
  %v1888 = vand.u32 %v110, 4294901760
  %1889 = vmatpush.msra.mxu0 %v1888
  %v1890 = vand.u32 %v109, 4294901760
  %1891 = vmatpush.msra.mxu0 %v1890
  %v1892 = vand.u32 %v108, 4294901760
  %1893 = vmatpush.msra.mxu0 %v1892
  %v1894 = vand.u32 %v107, 4294901760
  %1895 = vmatpush.msra.mxu0 %v1894
  %v1896 = vand.u32 %v106, 4294901760
  %1897 = vmatpush.msra.mxu0 %v1896
  %v1898 = vand.u32 %v105, 4294901760
  %1899 = vmatpush.msra.mxu0 %v1898
  %v1900 = vand.u32 %v104, 4294901760
  %1901 = vmatpush.msra.mxu0 %v1900
  %v1902 = vand.u32 %v103, 4294901760
  %1903 = vmatpush.msra.mxu0 %v1902
  %v1904 = vand.u32 %v102, 4294901760
  %1905 = vmatpush.msra.mxu0 %v1904
  %v1906 = vand.u32 %v101, 4294901760
  %1907 = vmatpush.msra.mxu0 %v1906
  %v1908 = vand.u32 %v100, 4294901760
  %1909 = vmatpush.msra.mxu0 %v1908
  %v1910 = vand.u32 %v99, 4294901760
  %1911 = vmatpush.msra.mxu0 %v1910
  %v1912 = vand.u32 %v98, 4294901760
  %1913 = vmatpush.msra.mxu0 %v1912
  %v1914 = vand.u32 %v166, 4294901760
  %v1915 = vsub.f32 %v166, %v1914
  %v1916 = vand.u32 %v1915, 4294901760
  %v1917 = vsub.f32 %v1915, %v1916
  %v1918 = vand.u32 %v1917, 4294901760
  %1919 = vmatmul.f32.gmra.mxu0 %v1918
  %v1920 = vpop.f32.mrf.mxu0
  %v1921 = vadd.f32 %v1880, %v1920
  %1922 = vdwg.mxu0
  %v1923 = vand.u32 %v113, 4294901760
  %v1924 = vsub.f32 %v113, %v1923
  %v1925 = vand.u32 %v1924, 4294901760
  %v1926 = vsub.f32 %v1924, %v1925
  %v1927 = vand.u32 %v1926, 4294901760
  %1928 = vmatpush.msra.mxu0 %v1927
  %v1929 = vand.u32 %v112, 4294901760
  %v1930 = vsub.f32 %v112, %v1929
  %v1931 = vand.u32 %v1930, 4294901760
  %v1932 = vsub.f32 %v1930, %v1931
  %v1933 = vand.u32 %v1932, 4294901760
  %1934 = vmatpush.msra.mxu0 %v1933
  %v1935 = vand.u32 %v111, 4294901760
  %v1936 = vsub.f32 %v111, %v1935
  %v1937 = vand.u32 %v1936, 4294901760
  %v1938 = vsub.f32 %v1936, %v1937
  %v1939 = vand.u32 %v1938, 4294901760
  %1940 = vmatpush.msra.mxu0 %v1939
  %v1941 = vand.u32 %v110, 4294901760
  %v1942 = vsub.f32 %v110, %v1941
  %v1943 = vand.u32 %v1942, 4294901760
  %v1944 = vsub.f32 %v1942, %v1943
  %v1945 = vand.u32 %v1944, 4294901760
  %1946 = vmatpush.msra.mxu0 %v1945
  %v1947 = vand.u32 %v109, 4294901760
  %v1948 = vsub.f32 %v109, %v1947
  %v1949 = vand.u32 %v1948, 4294901760
  %v1950 = vsub.f32 %v1948, %v1949
  %v1951 = vand.u32 %v1950, 4294901760
  %1952 = vmatpush.msra.mxu0 %v1951
  %v1953 = vand.u32 %v108, 4294901760
  %v1954 = vsub.f32 %v108, %v1953
  %v1955 = vand.u32 %v1954, 4294901760
  %v1956 = vsub.f32 %v1954, %v1955
  %v1957 = vand.u32 %v1956, 4294901760
  %1958 = vmatpush.msra.mxu0 %v1957
  %v1959 = vand.u32 %v107, 4294901760
  %v1960 = vsub.f32 %v107, %v1959
  %v1961 = vand.u32 %v1960, 4294901760
  %v1962 = vsub.f32 %v1960, %v1961
  %v1963 = vand.u32 %v1962, 4294901760
  %1964 = vmatpush.msra.mxu0 %v1963
  %v1965 = vand.u32 %v106, 4294901760
  %v1966 = vsub.f32 %v106, %v1965
  %v1967 = vand.u32 %v1966, 4294901760
  %v1968 = vsub.f32 %v1966, %v1967
  %v1969 = vand.u32 %v1968, 4294901760
  %1970 = vmatpush.msra.mxu0 %v1969
  %v1971 = vand.u32 %v105, 4294901760
  %v1972 = vsub.f32 %v105, %v1971
  %v1973 = vand.u32 %v1972, 4294901760
  %v1974 = vsub.f32 %v1972, %v1973
  %v1975 = vand.u32 %v1974, 4294901760
  %1976 = vmatpush.msra.mxu0 %v1975
  %v1977 = vand.u32 %v104, 4294901760
  %v1978 = vsub.f32 %v104, %v1977
  %v1979 = vand.u32 %v1978, 4294901760
  %v1980 = vsub.f32 %v1978, %v1979
  %v1981 = vand.u32 %v1980, 4294901760
  %1982 = vmatpush.msra.mxu0 %v1981
  %v1983 = vand.u32 %v103, 4294901760
  %v1984 = vsub.f32 %v103, %v1983
  %v1985 = vand.u32 %v1984, 4294901760
  %v1986 = vsub.f32 %v1984, %v1985
  %v1987 = vand.u32 %v1986, 4294901760
  %1988 = vmatpush.msra.mxu0 %v1987
  %v1989 = vand.u32 %v102, 4294901760
  %v1990 = vsub.f32 %v102, %v1989
  %v1991 = vand.u32 %v1990, 4294901760
  %v1992 = vsub.f32 %v1990, %v1991
  %v1993 = vand.u32 %v1992, 4294901760
  %1994 = vmatpush.msra.mxu0 %v1993
  %v1995 = vand.u32 %v101, 4294901760
  %v1996 = vsub.f32 %v101, %v1995
  %v1997 = vand.u32 %v1996, 4294901760
  %v1998 = vsub.f32 %v1996, %v1997
  %v1999 = vand.u32 %v1998, 4294901760
  %2000 = vmatpush.msra.mxu0 %v1999
  %v2001 = vand.u32 %v100, 4294901760
  %v2002 = vsub.f32 %v100, %v2001
  %v2003 = vand.u32 %v2002, 4294901760
  %v2004 = vsub.f32 %v2002, %v2003
  %v2005 = vand.u32 %v2004, 4294901760
  %2006 = vmatpush.msra.mxu0 %v2005
  %v2007 = vand.u32 %v99, 4294901760
  %v2008 = vsub.f32 %v99, %v2007
  %v2009 = vand.u32 %v2008, 4294901760
  %v2010 = vsub.f32 %v2008, %v2009
  %v2011 = vand.u32 %v2010, 4294901760
  %2012 = vmatpush.msra.mxu0 %v2011
  %v2013 = vand.u32 %v98, 4294901760
  %v2014 = vsub.f32 %v98, %v2013
  %v2015 = vand.u32 %v2014, 4294901760
  %v2016 = vsub.f32 %v2014, %v2015
  %v2017 = vand.u32 %v2016, 4294901760
  %2018 = vmatpush.msra.mxu0 %v2017
  %v2019 = vand.u32 %v166, 4294901760
  %2020 = vmatmul.f32.gmra.mxu0 %v2019
  %v2021 = vpop.f32.mrf.mxu0
  %v2022 = vadd.f32 %v1921, %v2021
  %2023 = vdwg.mxu0
  %v2024 = vand.u32 %v113, 4294901760
  %v2025 = vsub.f32 %v113, %v2024
  %2026 = vmatpush.msra.mxu0 %v2025
  %v2027 = vand.u32 %v112, 4294901760
  %v2028 = vsub.f32 %v112, %v2027
  %2029 = vmatpush.msra.mxu0 %v2028
  %v2030 = vand.u32 %v111, 4294901760
  %v2031 = vsub.f32 %v111, %v2030
  %2032 = vmatpush.msra.mxu0 %v2031
  %v2033 = vand.u32 %v110, 4294901760
  %v2034 = vsub.f32 %v110, %v2033
  %2035 = vmatpush.msra.mxu0 %v2034
  %v2036 = vand.u32 %v109, 4294901760
  %v2037 = vsub.f32 %v109, %v2036
  %2038 = vmatpush.msra.mxu0 %v2037
  %v2039 = vand.u32 %v108, 4294901760
  %v2040 = vsub.f32 %v108, %v2039
  %2041 = vmatpush.msra.mxu0 %v2040
  %v2042 = vand.u32 %v107, 4294901760
  %v2043 = vsub.f32 %v107, %v2042
  %2044 = vmatpush.msra.mxu0 %v2043
  %v2045 = vand.u32 %v106, 4294901760
  %v2046 = vsub.f32 %v106, %v2045
  %2047 = vmatpush.msra.mxu0 %v2046
  %v2048 = vand.u32 %v105, 4294901760
  %v2049 = vsub.f32 %v105, %v2048
  %2050 = vmatpush.msra.mxu0 %v2049
  %v2051 = vand.u32 %v104, 4294901760
  %v2052 = vsub.f32 %v104, %v2051
  %2053 = vmatpush.msra.mxu0 %v2052
  %v2054 = vand.u32 %v103, 4294901760
  %v2055 = vsub.f32 %v103, %v2054
  %2056 = vmatpush.msra.mxu0 %v2055
  %v2057 = vand.u32 %v102, 4294901760
  %v2058 = vsub.f32 %v102, %v2057
  %2059 = vmatpush.msra.mxu0 %v2058
  %v2060 = vand.u32 %v101, 4294901760
  %v2061 = vsub.f32 %v101, %v2060
  %2062 = vmatpush.msra.mxu0 %v2061
  %v2063 = vand.u32 %v100, 4294901760
  %v2064 = vsub.f32 %v100, %v2063
  %2065 = vmatpush.msra.mxu0 %v2064
  %v2066 = vand.u32 %v99, 4294901760
  %v2067 = vsub.f32 %v99, %v2066
  %2068 = vmatpush.msra.mxu0 %v2067
  %v2069 = vand.u32 %v98, 4294901760
  %v2070 = vsub.f32 %v98, %v2069
  %2071 = vmatpush.msra.mxu0 %v2070
  %v2072 = vand.u32 %v166, 4294901760
  %v2073 = vsub.f32 %v166, %v2072
  %2074 = vmatmul.f32.gmra.mxu0 %v2073
  %v2075 = vpop.f32.mrf.mxu0
  %v2076 = vadd.f32 %v2022, %v2075
  %2077 = vdwg.mxu0
  %v2078 = vand.u32 %v113, 4294901760
  %2079 = vmatpush.msra.mxu0 %v2078
  %v2080 = vand.u32 %v112, 4294901760
  %2081 = vmatpush.msra.mxu0 %v2080
  %v2082 = vand.u32 %v111, 4294901760
  %2083 = vmatpush.msra.mxu0 %v2082
  %v2084 = vand.u32 %v110, 4294901760
  %2085 = vmatpush.msra.mxu0 %v2084
  %v2086 = vand.u32 %v109, 4294901760
  %2087 = vmatpush.msra.mxu0 %v2086
  %v2088 = vand.u32 %v108, 4294901760
  %2089 = vmatpush.msra.mxu0 %v2088
  %v2090 = vand.u32 %v107, 4294901760
  %2091 = vmatpush.msra.mxu0 %v2090
  %v2092 = vand.u32 %v106, 4294901760
  %2093 = vmatpush.msra.mxu0 %v2092
  %v2094 = vand.u32 %v105, 4294901760
  %2095 = vmatpush.msra.mxu0 %v2094
  %v2096 = vand.u32 %v104, 4294901760
  %2097 = vmatpush.msra.mxu0 %v2096
  %v2098 = vand.u32 %v103, 4294901760
  %2099 = vmatpush.msra.mxu0 %v2098
  %v2100 = vand.u32 %v102, 4294901760
  %2101 = vmatpush.msra.mxu0 %v2100
  %v2102 = vand.u32 %v101, 4294901760
  %2103 = vmatpush.msra.mxu0 %v2102
  %v2104 = vand.u32 %v100, 4294901760
  %2105 = vmatpush.msra.mxu0 %v2104
  %v2106 = vand.u32 %v99, 4294901760
  %2107 = vmatpush.msra.mxu0 %v2106
  %v2108 = vand.u32 %v98, 4294901760
  %2109 = vmatpush.msra.mxu0 %v2108
  %v2110 = vand.u32 %v166, 4294901760
  %v2111 = vsub.f32 %v166, %v2110
  %v2112 = vand.u32 %v2111, 4294901760
  %2113 = vmatmul.f32.gmra.mxu0 %v2112
  %v2114 = vpop.f32.mrf.mxu0
  %v2115 = vadd.f32 %v2076, %v2114
  %2116 = vdwg.mxu0
  %v2117 = vand.u32 %v113, 4294901760
  %v2118 = vsub.f32 %v113, %v2117
  %v2119 = vand.u32 %v2118, 4294901760
  %2120 = vmatpush.msra.mxu0 %v2119
  %v2121 = vand.u32 %v112, 4294901760
  %v2122 = vsub.f32 %v112, %v2121
  %v2123 = vand.u32 %v2122, 4294901760
  %2124 = vmatpush.msra.mxu0 %v2123
  %v2125 = vand.u32 %v111, 4294901760
  %v2126 = vsub.f32 %v111, %v2125
  %v2127 = vand.u32 %v2126, 4294901760
  %2128 = vmatpush.msra.mxu0 %v2127
  %v2129 = vand.u32 %v110, 4294901760
  %v2130 = vsub.f32 %v110, %v2129
  %v2131 = vand.u32 %v2130, 4294901760
  %2132 = vmatpush.msra.mxu0 %v2131
  %v2133 = vand.u32 %v109, 4294901760
  %v2134 = vsub.f32 %v109, %v2133
  %v2135 = vand.u32 %v2134, 4294901760
  %2136 = vmatpush.msra.mxu0 %v2135
  %v2137 = vand.u32 %v108, 4294901760
  %v2138 = vsub.f32 %v108, %v2137
  %v2139 = vand.u32 %v2138, 4294901760
  %2140 = vmatpush.msra.mxu0 %v2139
  %v2141 = vand.u32 %v107, 4294901760
  %v2142 = vsub.f32 %v107, %v2141
  %v2143 = vand.u32 %v2142, 4294901760
  %2144 = vmatpush.msra.mxu0 %v2143
  %v2145 = vand.u32 %v106, 4294901760
  %v2146 = vsub.f32 %v106, %v2145
  %v2147 = vand.u32 %v2146, 4294901760
  %2148 = vmatpush.msra.mxu0 %v2147
  %v2149 = vand.u32 %v105, 4294901760
  %v2150 = vsub.f32 %v105, %v2149
  %v2151 = vand.u32 %v2150, 4294901760
  %2152 = vmatpush.msra.mxu0 %v2151
  %v2153 = vand.u32 %v104, 4294901760
  %v2154 = vsub.f32 %v104, %v2153
  %v2155 = vand.u32 %v2154, 4294901760
  %2156 = vmatpush.msra.mxu0 %v2155
  %v2157 = vand.u32 %v103, 4294901760
  %v2158 = vsub.f32 %v103, %v2157
  %v2159 = vand.u32 %v2158, 4294901760
  %2160 = vmatpush.msra.mxu0 %v2159
  %v2161 = vand.u32 %v102, 4294901760
  %v2162 = vsub.f32 %v102, %v2161
  %v2163 = vand.u32 %v2162, 4294901760
  %2164 = vmatpush.msra.mxu0 %v2163
  %v2165 = vand.u32 %v101, 4294901760
  %v2166 = vsub.f32 %v101, %v2165
  %v2167 = vand.u32 %v2166, 4294901760
  %2168 = vmatpush.msra.mxu0 %v2167
  %v2169 = vand.u32 %v100, 4294901760
  %v2170 = vsub.f32 %v100, %v2169
  %v2171 = vand.u32 %v2170, 4294901760
  %2172 = vmatpush.msra.mxu0 %v2171
  %v2173 = vand.u32 %v99, 4294901760
  %v2174 = vsub.f32 %v99, %v2173
  %v2175 = vand.u32 %v2174, 4294901760
  %2176 = vmatpush.msra.mxu0 %v2175
  %v2177 = vand.u32 %v98, 4294901760
  %v2178 = vsub.f32 %v98, %v2177
  %v2179 = vand.u32 %v2178, 4294901760
  %2180 = vmatpush.msra.mxu0 %v2179
  %v2181 = vand.u32 %v166, 4294901760
  %2182 = vmatmul.f32.gmra.mxu0 %v2181
  %v2183 = vpop.f32.mrf.mxu0
  %v2184 = vadd.f32 %v2115, %v2183
  %2185 = vdwg.mxu0
  %v2186 = vand.u32 %v113, 4294901760
  %2187 = vmatpush.msra.mxu0 %v2186
  %v2188 = vand.u32 %v112, 4294901760
  %2189 = vmatpush.msra.mxu0 %v2188
  %v2190 = vand.u32 %v111, 4294901760
  %2191 = vmatpush.msra.mxu0 %v2190
  %v2192 = vand.u32 %v110, 4294901760
  %2193 = vmatpush.msra.mxu0 %v2192
  %v2194 = vand.u32 %v109, 4294901760
  %2195 = vmatpush.msra.mxu0 %v2194
  %v2196 = vand.u32 %v108, 4294901760
  %2197 = vmatpush.msra.mxu0 %v2196
  %v2198 = vand.u32 %v107, 4294901760
  %2199 = vmatpush.msra.mxu0 %v2198
  %v2200 = vand.u32 %v106, 4294901760
  %2201 = vmatpush.msra.mxu0 %v2200
  %v2202 = vand.u32 %v105, 4294901760
  %2203 = vmatpush.msra.mxu0 %v2202
  %v2204 = vand.u32 %v104, 4294901760
  %2205 = vmatpush.msra.mxu0 %v2204
  %v2206 = vand.u32 %v103, 4294901760
  %2207 = vmatpush.msra.mxu0 %v2206
  %v2208 = vand.u32 %v102, 4294901760
  %2209 = vmatpush.msra.mxu0 %v2208
  %v2210 = vand.u32 %v101, 4294901760
  %2211 = vmatpush.msra.mxu0 %v2210
  %v2212 = vand.u32 %v100, 4294901760
  %2213 = vmatpush.msra.mxu0 %v2212
  %v2214 = vand.u32 %v99, 4294901760
  %2215 = vmatpush.msra.mxu0 %v2214
  %v2216 = vand.u32 %v98, 4294901760
  %2217 = vmatpush.msra.mxu0 %v2216
  %v2218 = vand.u32 %v166, 4294901760
  %2219 = vmatmul.f32.gmra.mxu0 %v2218
  %v2220 = vpop.f32.mrf.mxu0
  %v2221 = vadd.f32 %v2184, %v2220
  %2222 = vdwg.mxu0
  %v2223 = vand.u32 %v129, 4294901760
  %2224 = vmatpush.msra.mxu0 %v2223
  %v2225 = vand.u32 %v128, 4294901760
  %2226 = vmatpush.msra.mxu0 %v2225
  %v2227 = vand.u32 %v127, 4294901760
  %2228 = vmatpush.msra.mxu0 %v2227
  %v2229 = vand.u32 %v126, 4294901760
  %2230 = vmatpush.msra.mxu0 %v2229
  %v2231 = vand.u32 %v125, 4294901760
  %2232 = vmatpush.msra.mxu0 %v2231
  %v2233 = vand.u32 %v124, 4294901760
  %2234 = vmatpush.msra.mxu0 %v2233
  %v2235 = vand.u32 %v123, 4294901760
  %2236 = vmatpush.msra.mxu0 %v2235
  %v2237 = vand.u32 %v122, 4294901760
  %2238 = vmatpush.msra.mxu0 %v2237
  %v2239 = vand.u32 %v121, 4294901760
  %2240 = vmatpush.msra.mxu0 %v2239
  %v2241 = vand.u32 %v120, 4294901760
  %2242 = vmatpush.msra.mxu0 %v2241
  %v2243 = vand.u32 %v119, 4294901760
  %2244 = vmatpush.msra.mxu0 %v2243
  %v2245 = vand.u32 %v118, 4294901760
  %2246 = vmatpush.msra.mxu0 %v2245
  %v2247 = vand.u32 %v117, 4294901760
  %2248 = vmatpush.msra.mxu0 %v2247
  %v2249 = vand.u32 %v116, 4294901760
  %2250 = vmatpush.msra.mxu0 %v2249
  %v2251 = vand.u32 %v115, 4294901760
  %2252 = vmatpush.msra.mxu0 %v2251
  %v2253 = vand.u32 %v114, 4294901760
  %2254 = vmatpush.msra.mxu0 %v2253
  %v2255 = vand.u32 %v167, 4294901760
  %v2256 = vsub.f32 %v167, %v2255
  %v2257 = vand.u32 %v2256, 4294901760
  %v2258 = vsub.f32 %v2256, %v2257
  %v2259 = vand.u32 %v2258, 4294901760
  %2260 = vmatmul.f32.gmra.mxu0 %v2259
  %v2261 = vpop.f32.mrf.mxu0
  %v2262 = vadd.f32 %v2221, %v2261
  %2263 = vdwg.mxu0
  %v2264 = vand.u32 %v129, 4294901760
  %v2265 = vsub.f32 %v129, %v2264
  %v2266 = vand.u32 %v2265, 4294901760
  %v2267 = vsub.f32 %v2265, %v2266
  %v2268 = vand.u32 %v2267, 4294901760
  %2269 = vmatpush.msra.mxu0 %v2268
  %v2270 = vand.u32 %v128, 4294901760
  %v2271 = vsub.f32 %v128, %v2270
  %v2272 = vand.u32 %v2271, 4294901760
  %v2273 = vsub.f32 %v2271, %v2272
  %v2274 = vand.u32 %v2273, 4294901760
  %2275 = vmatpush.msra.mxu0 %v2274
  %v2276 = vand.u32 %v127, 4294901760
  %v2277 = vsub.f32 %v127, %v2276
  %v2278 = vand.u32 %v2277, 4294901760
  %v2279 = vsub.f32 %v2277, %v2278
  %v2280 = vand.u32 %v2279, 4294901760
  %2281 = vmatpush.msra.mxu0 %v2280
  %v2282 = vand.u32 %v126, 4294901760
  %v2283 = vsub.f32 %v126, %v2282
  %v2284 = vand.u32 %v2283, 4294901760
  %v2285 = vsub.f32 %v2283, %v2284
  %v2286 = vand.u32 %v2285, 4294901760
  %2287 = vmatpush.msra.mxu0 %v2286
  %v2288 = vand.u32 %v125, 4294901760
  %v2289 = vsub.f32 %v125, %v2288
  %v2290 = vand.u32 %v2289, 4294901760
  %v2291 = vsub.f32 %v2289, %v2290
  %v2292 = vand.u32 %v2291, 4294901760
  %2293 = vmatpush.msra.mxu0 %v2292
  %v2294 = vand.u32 %v124, 4294901760
  %v2295 = vsub.f32 %v124, %v2294
  %v2296 = vand.u32 %v2295, 4294901760
  %v2297 = vsub.f32 %v2295, %v2296
  %v2298 = vand.u32 %v2297, 4294901760
  %2299 = vmatpush.msra.mxu0 %v2298
  %v2300 = vand.u32 %v123, 4294901760
  %v2301 = vsub.f32 %v123, %v2300
  %v2302 = vand.u32 %v2301, 4294901760
  %v2303 = vsub.f32 %v2301, %v2302
  %v2304 = vand.u32 %v2303, 4294901760
  %2305 = vmatpush.msra.mxu0 %v2304
  %v2306 = vand.u32 %v122, 4294901760
  %v2307 = vsub.f32 %v122, %v2306
  %v2308 = vand.u32 %v2307, 4294901760
  %v2309 = vsub.f32 %v2307, %v2308
  %v2310 = vand.u32 %v2309, 4294901760
  %2311 = vmatpush.msra.mxu0 %v2310
  %v2312 = vand.u32 %v121, 4294901760
  %v2313 = vsub.f32 %v121, %v2312
  %v2314 = vand.u32 %v2313, 4294901760
  %v2315 = vsub.f32 %v2313, %v2314
  %v2316 = vand.u32 %v2315, 4294901760
  %2317 = vmatpush.msra.mxu0 %v2316
  %v2318 = vand.u32 %v120, 4294901760
  %v2319 = vsub.f32 %v120, %v2318
  %v2320 = vand.u32 %v2319, 4294901760
  %v2321 = vsub.f32 %v2319, %v2320
  %v2322 = vand.u32 %v2321, 4294901760
  %2323 = vmatpush.msra.mxu0 %v2322
  %v2324 = vand.u32 %v119, 4294901760
  %v2325 = vsub.f32 %v119, %v2324
  %v2326 = vand.u32 %v2325, 4294901760
  %v2327 = vsub.f32 %v2325, %v2326
  %v2328 = vand.u32 %v2327, 4294901760
  %2329 = vmatpush.msra.mxu0 %v2328
  %v2330 = vand.u32 %v118, 4294901760
  %v2331 = vsub.f32 %v118, %v2330
  %v2332 = vand.u32 %v2331, 4294901760
  %v2333 = vsub.f32 %v2331, %v2332
  %v2334 = vand.u32 %v2333, 4294901760
  %2335 = vmatpush.msra.mxu0 %v2334
  %v2336 = vand.u32 %v117, 4294901760
  %v2337 = vsub.f32 %v117, %v2336
  %v2338 = vand.u32 %v2337, 4294901760
  %v2339 = vsub.f32 %v2337, %v2338
  %v2340 = vand.u32 %v2339, 4294901760
  %2341 = vmatpush.msra.mxu0 %v2340
  %v2342 = vand.u32 %v116, 4294901760
  %v2343 = vsub.f32 %v116, %v2342
  %v2344 = vand.u32 %v2343, 4294901760
  %v2345 = vsub.f32 %v2343, %v2344
  %v2346 = vand.u32 %v2345, 4294901760
  %2347 = vmatpush.msra.mxu0 %v2346
  %v2348 = vand.u32 %v115, 4294901760
  %v2349 = vsub.f32 %v115, %v2348
  %v2350 = vand.u32 %v2349, 4294901760
  %v2351 = vsub.f32 %v2349, %v2350
  %v2352 = vand.u32 %v2351, 4294901760
  %2353 = vmatpush.msra.mxu0 %v2352
  %v2354 = vand.u32 %v114, 4294901760
  %v2355 = vsub.f32 %v114, %v2354
  %v2356 = vand.u32 %v2355, 4294901760
  %v2357 = vsub.f32 %v2355, %v2356
  %v2358 = vand.u32 %v2357, 4294901760
  %2359 = vmatpush.msra.mxu0 %v2358
  %v2360 = vand.u32 %v167, 4294901760
  %2361 = vmatmul.f32.gmra.mxu0 %v2360
  %v2362 = vpop.f32.mrf.mxu0
  %v2363 = vadd.f32 %v2262, %v2362
  %2364 = vdwg.mxu0
  %v2365 = vand.u32 %v129, 4294901760
  %v2366 = vsub.f32 %v129, %v2365
  %2367 = vmatpush.msra.mxu0 %v2366
  %v2368 = vand.u32 %v128, 4294901760
  %v2369 = vsub.f32 %v128, %v2368
  %2370 = vmatpush.msra.mxu0 %v2369
  %v2371 = vand.u32 %v127, 4294901760
  %v2372 = vsub.f32 %v127, %v2371
  %2373 = vmatpush.msra.mxu0 %v2372
  %v2374 = vand.u32 %v126, 4294901760
  %v2375 = vsub.f32 %v126, %v2374
  %2376 = vmatpush.msra.mxu0 %v2375
  %v2377 = vand.u32 %v125, 4294901760
  %v2378 = vsub.f32 %v125, %v2377
  %2379 = vmatpush.msra.mxu0 %v2378
  %v2380 = vand.u32 %v124, 4294901760
  %v2381 = vsub.f32 %v124, %v2380
  %2382 = vmatpush.msra.mxu0 %v2381
  %v2383 = vand.u32 %v123, 4294901760
  %v2384 = vsub.f32 %v123, %v2383
  %2385 = vmatpush.msra.mxu0 %v2384
  %v2386 = vand.u32 %v122, 4294901760
  %v2387 = vsub.f32 %v122, %v2386
  %2388 = vmatpush.msra.mxu0 %v2387
  %v2389 = vand.u32 %v121, 4294901760
  %v2390 = vsub.f32 %v121, %v2389
  %2391 = vmatpush.msra.mxu0 %v2390
  %v2392 = vand.u32 %v120, 4294901760
  %v2393 = vsub.f32 %v120, %v2392
  %2394 = vmatpush.msra.mxu0 %v2393
  %v2395 = vand.u32 %v119, 4294901760
  %v2396 = vsub.f32 %v119, %v2395
  %2397 = vmatpush.msra.mxu0 %v2396
  %v2398 = vand.u32 %v118, 4294901760
  %v2399 = vsub.f32 %v118, %v2398
  %2400 = vmatpush.msra.mxu0 %v2399
  %v2401 = vand.u32 %v117, 4294901760
  %v2402 = vsub.f32 %v117, %v2401
  %2403 = vmatpush.msra.mxu0 %v2402
  %v2404 = vand.u32 %v116, 4294901760
  %v2405 = vsub.f32 %v116, %v2404
  %2406 = vmatpush.msra.mxu0 %v2405
  %v2407 = vand.u32 %v115, 4294901760
  %v2408 = vsub.f32 %v115, %v2407
  %2409 = vmatpush.msra.mxu0 %v2408
  %v2410 = vand.u32 %v114, 4294901760
  %v2411 = vsub.f32 %v114, %v2410
  %2412 = vmatpush.msra.mxu0 %v2411
  %v2413 = vand.u32 %v167, 4294901760
  %v2414 = vsub.f32 %v167, %v2413
  %2415 = vmatmul.f32.gmra.mxu0 %v2414
  %v2416 = vpop.f32.mrf.mxu0
  %v2417 = vadd.f32 %v2363, %v2416
  %2418 = vdwg.mxu0
  %v2419 = vand.u32 %v129, 4294901760
  %2420 = vmatpush.msra.mxu0 %v2419
  %v2421 = vand.u32 %v128, 4294901760
  %2422 = vmatpush.msra.mxu0 %v2421
  %v2423 = vand.u32 %v127, 4294901760
  %2424 = vmatpush.msra.mxu0 %v2423
  %v2425 = vand.u32 %v126, 4294901760
  %2426 = vmatpush.msra.mxu0 %v2425
  %v2427 = vand.u32 %v125, 4294901760
  %2428 = vmatpush.msra.mxu0 %v2427
  %v2429 = vand.u32 %v124, 4294901760
  %2430 = vmatpush.msra.mxu0 %v2429
  %v2431 = vand.u32 %v123, 4294901760
  %2432 = vmatpush.msra.mxu0 %v2431
  %v2433 = vand.u32 %v122, 4294901760
  %2434 = vmatpush.msra.mxu0 %v2433
  %v2435 = vand.u32 %v121, 4294901760
  %2436 = vmatpush.msra.mxu0 %v2435
  %v2437 = vand.u32 %v120, 4294901760
  %2438 = vmatpush.msra.mxu0 %v2437
  %v2439 = vand.u32 %v119, 4294901760
  %2440 = vmatpush.msra.mxu0 %v2439
  %v2441 = vand.u32 %v118, 4294901760
  %2442 = vmatpush.msra.mxu0 %v2441
  %v2443 = vand.u32 %v117, 4294901760
  %2444 = vmatpush.msra.mxu0 %v2443
  %v2445 = vand.u32 %v116, 4294901760
  %2446 = vmatpush.msra.mxu0 %v2445
  %v2447 = vand.u32 %v115, 4294901760
  %2448 = vmatpush.msra.mxu0 %v2447
  %v2449 = vand.u32 %v114, 4294901760
  %2450 = vmatpush.msra.mxu0 %v2449
  %v2451 = vand.u32 %v167, 4294901760
  %v2452 = vsub.f32 %v167, %v2451
  %v2453 = vand.u32 %v2452, 4294901760
  %2454 = vmatmul.f32.gmra.mxu0 %v2453
  %v2455 = vpop.f32.mrf.mxu0
  %v2456 = vadd.f32 %v2417, %v2455
  %2457 = vdwg.mxu0
  %v2458 = vand.u32 %v129, 4294901760
  %v2459 = vsub.f32 %v129, %v2458
  %v2460 = vand.u32 %v2459, 4294901760
  %2461 = vmatpush.msra.mxu0 %v2460
  %v2462 = vand.u32 %v128, 4294901760
  %v2463 = vsub.f32 %v128, %v2462
  %v2464 = vand.u32 %v2463, 4294901760
  %2465 = vmatpush.msra.mxu0 %v2464
  %v2466 = vand.u32 %v127, 4294901760
  %v2467 = vsub.f32 %v127, %v2466
  %v2468 = vand.u32 %v2467, 4294901760
  %2469 = vmatpush.msra.mxu0 %v2468
  %v2470 = vand.u32 %v126, 4294901760
  %v2471 = vsub.f32 %v126, %v2470
  %v2472 = vand.u32 %v2471, 4294901760
  %2473 = vmatpush.msra.mxu0 %v2472
  %v2474 = vand.u32 %v125, 4294901760
  %v2475 = vsub.f32 %v125, %v2474
  %v2476 = vand.u32 %v2475, 4294901760
  %2477 = vmatpush.msra.mxu0 %v2476
  %v2478 = vand.u32 %v124, 4294901760
  %v2479 = vsub.f32 %v124, %v2478
  %v2480 = vand.u32 %v2479, 4294901760
  %2481 = vmatpush.msra.mxu0 %v2480
  %v2482 = vand.u32 %v123, 4294901760
  %v2483 = vsub.f32 %v123, %v2482
  %v2484 = vand.u32 %v2483, 4294901760
  %2485 = vmatpush.msra.mxu0 %v2484
  %v2486 = vand.u32 %v122, 4294901760
  %v2487 = vsub.f32 %v122, %v2486
  %v2488 = vand.u32 %v2487, 4294901760
  %2489 = vmatpush.msra.mxu0 %v2488
  %v2490 = vand.u32 %v121, 4294901760
  %v2491 = vsub.f32 %v121, %v2490
  %v2492 = vand.u32 %v2491, 4294901760
  %2493 = vmatpush.msra.mxu0 %v2492
  %v2494 = vand.u32 %v120, 4294901760
  %v2495 = vsub.f32 %v120, %v2494
  %v2496 = vand.u32 %v2495, 4294901760
  %2497 = vmatpush.msra.mxu0 %v2496
  %v2498 = vand.u32 %v119, 4294901760
  %v2499 = vsub.f32 %v119, %v2498
  %v2500 = vand.u32 %v2499, 4294901760
  %2501 = vmatpush.msra.mxu0 %v2500
  %v2502 = vand.u32 %v118, 4294901760
  %v2503 = vsub.f32 %v118, %v2502
  %v2504 = vand.u32 %v2503, 4294901760
  %2505 = vmatpush.msra.mxu0 %v2504
  %v2506 = vand.u32 %v117, 4294901760
  %v2507 = vsub.f32 %v117, %v2506
  %v2508 = vand.u32 %v2507, 4294901760
  %2509 = vmatpush.msra.mxu0 %v2508
  %v2510 = vand.u32 %v116, 4294901760
  %v2511 = vsub.f32 %v116, %v2510
  %v2512 = vand.u32 %v2511, 4294901760
  %2513 = vmatpush.msra.mxu0 %v2512
  %v2514 = vand.u32 %v115, 4294901760
  %v2515 = vsub.f32 %v115, %v2514
  %v2516 = vand.u32 %v2515, 4294901760
  %2517 = vmatpush.msra.mxu0 %v2516
  %v2518 = vand.u32 %v114, 4294901760
  %v2519 = vsub.f32 %v114, %v2518
  %v2520 = vand.u32 %v2519, 4294901760
  %2521 = vmatpush.msra.mxu0 %v2520
  %v2522 = vand.u32 %v167, 4294901760
  %2523 = vmatmul.f32.gmra.mxu0 %v2522
  %v2524 = vpop.f32.mrf.mxu0
  %v2525 = vadd.f32 %v2456, %v2524
  %2526 = vdwg.mxu0
  %v2527 = vand.u32 %v129, 4294901760
  %2528 = vmatpush.msra.mxu0 %v2527
  %v2529 = vand.u32 %v128, 4294901760
  %2530 = vmatpush.msra.mxu0 %v2529
  %v2531 = vand.u32 %v127, 4294901760
  %2532 = vmatpush.msra.mxu0 %v2531
  %v2533 = vand.u32 %v126, 4294901760
  %2534 = vmatpush.msra.mxu0 %v2533
  %v2535 = vand.u32 %v125, 4294901760
  %2536 = vmatpush.msra.mxu0 %v2535
  %v2537 = vand.u32 %v124, 4294901760
  %2538 = vmatpush.msra.mxu0 %v2537
  %v2539 = vand.u32 %v123, 4294901760
  %2540 = vmatpush.msra.mxu0 %v2539
  %v2541 = vand.u32 %v122, 4294901760
  %2542 = vmatpush.msra.mxu0 %v2541
  %v2543 = vand.u32 %v121, 4294901760
  %2544 = vmatpush.msra.mxu0 %v2543
  %v2545 = vand.u32 %v120, 4294901760
  %2546 = vmatpush.msra.mxu0 %v2545
  %v2547 = vand.u32 %v119, 4294901760
  %2548 = vmatpush.msra.mxu0 %v2547
  %v2549 = vand.u32 %v118, 4294901760
  %2550 = vmatpush.msra.mxu0 %v2549
  %v2551 = vand.u32 %v117, 4294901760
  %2552 = vmatpush.msra.mxu0 %v2551
  %v2553 = vand.u32 %v116, 4294901760
  %2554 = vmatpush.msra.mxu0 %v2553
  %v2555 = vand.u32 %v115, 4294901760
  %2556 = vmatpush.msra.mxu0 %v2555
  %v2557 = vand.u32 %v114, 4294901760
  %2558 = vmatpush.msra.mxu0 %v2557
  %v2559 = vand.u32 %v167, 4294901760
  %2560 = vmatmul.f32.gmra.mxu0 %v2559
  %v2561 = vpop.f32.mrf.mxu0
  %v2562 = vadd.f32 %v2525, %v2561
  %2563 = vdwg.mxu0
  %v2564 = vand.u32 %v145, 4294901760
  %2565 = vmatpush.msra.mxu0 %v2564
  %v2566 = vand.u32 %v144, 4294901760
  %2567 = vmatpush.msra.mxu0 %v2566
  %v2568 = vand.u32 %v143, 4294901760
  %2569 = vmatpush.msra.mxu0 %v2568
  %v2570 = vand.u32 %v142, 4294901760
  %2571 = vmatpush.msra.mxu0 %v2570
  %v2572 = vand.u32 %v141, 4294901760
  %2573 = vmatpush.msra.mxu0 %v2572
  %v2574 = vand.u32 %v140, 4294901760
  %2575 = vmatpush.msra.mxu0 %v2574
  %v2576 = vand.u32 %v139, 4294901760
  %2577 = vmatpush.msra.mxu0 %v2576
  %v2578 = vand.u32 %v138, 4294901760
  %2579 = vmatpush.msra.mxu0 %v2578
  %v2580 = vand.u32 %v137, 4294901760
  %2581 = vmatpush.msra.mxu0 %v2580
  %v2582 = vand.u32 %v136, 4294901760
  %2583 = vmatpush.msra.mxu0 %v2582
  %v2584 = vand.u32 %v135, 4294901760
  %2585 = vmatpush.msra.mxu0 %v2584
  %v2586 = vand.u32 %v134, 4294901760
  %2587 = vmatpush.msra.mxu0 %v2586
  %v2588 = vand.u32 %v133, 4294901760
  %2589 = vmatpush.msra.mxu0 %v2588
  %v2590 = vand.u32 %v132, 4294901760
  %2591 = vmatpush.msra.mxu0 %v2590
  %v2592 = vand.u32 %v131, 4294901760
  %2593 = vmatpush.msra.mxu0 %v2592
  %v2594 = vand.u32 %v130, 4294901760
  %2595 = vmatpush.msra.mxu0 %v2594
  %v2596 = vand.u32 %v168, 4294901760
  %v2597 = vsub.f32 %v168, %v2596
  %v2598 = vand.u32 %v2597, 4294901760
  %v2599 = vsub.f32 %v2597, %v2598
  %v2600 = vand.u32 %v2599, 4294901760
  %2601 = vmatmul.f32.gmra.mxu0 %v2600
  %v2602 = vpop.f32.mrf.mxu0
  %v2603 = vadd.f32 %v2562, %v2602
  %2604 = vdwg.mxu0
  %v2605 = vand.u32 %v145, 4294901760
  %v2606 = vsub.f32 %v145, %v2605
  %v2607 = vand.u32 %v2606, 4294901760
  %v2608 = vsub.f32 %v2606, %v2607
  %v2609 = vand.u32 %v2608, 4294901760
  %2610 = vmatpush.msra.mxu0 %v2609
  %v2611 = vand.u32 %v144, 4294901760
  %v2612 = vsub.f32 %v144, %v2611
  %v2613 = vand.u32 %v2612, 4294901760
  %v2614 = vsub.f32 %v2612, %v2613
  %v2615 = vand.u32 %v2614, 4294901760
  %2616 = vmatpush.msra.mxu0 %v2615
  %v2617 = vand.u32 %v143, 4294901760
  %v2618 = vsub.f32 %v143, %v2617
  %v2619 = vand.u32 %v2618, 4294901760
  %v2620 = vsub.f32 %v2618, %v2619
  %v2621 = vand.u32 %v2620, 4294901760
  %2622 = vmatpush.msra.mxu0 %v2621
  %v2623 = vand.u32 %v142, 4294901760
  %v2624 = vsub.f32 %v142, %v2623
  %v2625 = vand.u32 %v2624, 4294901760
  %v2626 = vsub.f32 %v2624, %v2625
  %v2627 = vand.u32 %v2626, 4294901760
  %2628 = vmatpush.msra.mxu0 %v2627
  %v2629 = vand.u32 %v141, 4294901760
  %v2630 = vsub.f32 %v141, %v2629
  %v2631 = vand.u32 %v2630, 4294901760
  %v2632 = vsub.f32 %v2630, %v2631
  %v2633 = vand.u32 %v2632, 4294901760
  %2634 = vmatpush.msra.mxu0 %v2633
  %v2635 = vand.u32 %v140, 4294901760
  %v2636 = vsub.f32 %v140, %v2635
  %v2637 = vand.u32 %v2636, 4294901760
  %v2638 = vsub.f32 %v2636, %v2637
  %v2639 = vand.u32 %v2638, 4294901760
  %2640 = vmatpush.msra.mxu0 %v2639
  %v2641 = vand.u32 %v139, 4294901760
  %v2642 = vsub.f32 %v139, %v2641
  %v2643 = vand.u32 %v2642, 4294901760
  %v2644 = vsub.f32 %v2642, %v2643
  %v2645 = vand.u32 %v2644, 4294901760
  %2646 = vmatpush.msra.mxu0 %v2645
  %v2647 = vand.u32 %v138, 4294901760
  %v2648 = vsub.f32 %v138, %v2647
  %v2649 = vand.u32 %v2648, 4294901760
  %v2650 = vsub.f32 %v2648, %v2649
  %v2651 = vand.u32 %v2650, 4294901760
  %2652 = vmatpush.msra.mxu0 %v2651
  %v2653 = vand.u32 %v137, 4294901760
  %v2654 = vsub.f32 %v137, %v2653
  %v2655 = vand.u32 %v2654, 4294901760
  %v2656 = vsub.f32 %v2654, %v2655
  %v2657 = vand.u32 %v2656, 4294901760
  %2658 = vmatpush.msra.mxu0 %v2657
  %v2659 = vand.u32 %v136, 4294901760
  %v2660 = vsub.f32 %v136, %v2659
  %v2661 = vand.u32 %v2660, 4294901760
  %v2662 = vsub.f32 %v2660, %v2661
  %v2663 = vand.u32 %v2662, 4294901760
  %2664 = vmatpush.msra.mxu0 %v2663
  %v2665 = vand.u32 %v135, 4294901760
  %v2666 = vsub.f32 %v135, %v2665
  %v2667 = vand.u32 %v2666, 4294901760
  %v2668 = vsub.f32 %v2666, %v2667
  %v2669 = vand.u32 %v2668, 4294901760
  %2670 = vmatpush.msra.mxu0 %v2669
  %v2671 = vand.u32 %v134, 4294901760
  %v2672 = vsub.f32 %v134, %v2671
  %v2673 = vand.u32 %v2672, 4294901760
  %v2674 = vsub.f32 %v2672, %v2673
  %v2675 = vand.u32 %v2674, 4294901760
  %2676 = vmatpush.msra.mxu0 %v2675
  %v2677 = vand.u32 %v133, 4294901760
  %v2678 = vsub.f32 %v133, %v2677
  %v2679 = vand.u32 %v2678, 4294901760
  %v2680 = vsub.f32 %v2678, %v2679
  %v2681 = vand.u32 %v2680, 4294901760
  %2682 = vmatpush.msra.mxu0 %v2681
  %v2683 = vand.u32 %v132, 4294901760
  %v2684 = vsub.f32 %v132, %v2683
  %v2685 = vand.u32 %v2684, 4294901760
  %v2686 = vsub.f32 %v2684, %v2685
  %v2687 = vand.u32 %v2686, 4294901760
  %2688 = vmatpush.msra.mxu0 %v2687
  %v2689 = vand.u32 %v131, 4294901760
  %v2690 = vsub.f32 %v131, %v2689
  %v2691 = vand.u32 %v2690, 4294901760
  %v2692 = vsub.f32 %v2690, %v2691
  %v2693 = vand.u32 %v2692, 4294901760
  %2694 = vmatpush.msra.mxu0 %v2693
  %v2695 = vand.u32 %v130, 4294901760
  %v2696 = vsub.f32 %v130, %v2695
  %v2697 = vand.u32 %v2696, 4294901760
  %v2698 = vsub.f32 %v2696, %v2697
  %v2699 = vand.u32 %v2698, 4294901760
  %2700 = vmatpush.msra.mxu0 %v2699
  %v2701 = vand.u32 %v168, 4294901760
  %2702 = vmatmul.f32.gmra.mxu0 %v2701
  %v2703 = vpop.f32.mrf.mxu0
  %v2704 = vadd.f32 %v2603, %v2703
  %2705 = vdwg.mxu0
  %v2706 = vand.u32 %v145, 4294901760
  %v2707 = vsub.f32 %v145, %v2706
  %2708 = vmatpush.msra.mxu0 %v2707
  %v2709 = vand.u32 %v144, 4294901760
  %v2710 = vsub.f32 %v144, %v2709
  %2711 = vmatpush.msra.mxu0 %v2710
  %v2712 = vand.u32 %v143, 4294901760
  %v2713 = vsub.f32 %v143, %v2712
  %2714 = vmatpush.msra.mxu0 %v2713
  %v2715 = vand.u32 %v142, 4294901760
  %v2716 = vsub.f32 %v142, %v2715
  %2717 = vmatpush.msra.mxu0 %v2716
  %v2718 = vand.u32 %v141, 4294901760
  %v2719 = vsub.f32 %v141, %v2718
  %2720 = vmatpush.msra.mxu0 %v2719
  %v2721 = vand.u32 %v140, 4294901760
  %v2722 = vsub.f32 %v140, %v2721
  %2723 = vmatpush.msra.mxu0 %v2722
  %v2724 = vand.u32 %v139, 4294901760
  %v2725 = vsub.f32 %v139, %v2724
  %2726 = vmatpush.msra.mxu0 %v2725
  %v2727 = vand.u32 %v138, 4294901760
  %v2728 = vsub.f32 %v138, %v2727
  %2729 = vmatpush.msra.mxu0 %v2728
  %v2730 = vand.u32 %v137, 4294901760
  %v2731 = vsub.f32 %v137, %v2730
  %2732 = vmatpush.msra.mxu0 %v2731
  %v2733 = vand.u32 %v136, 4294901760
  %v2734 = vsub.f32 %v136, %v2733
  %2735 = vmatpush.msra.mxu0 %v2734
  %v2736 = vand.u32 %v135, 4294901760
  %v2737 = vsub.f32 %v135, %v2736
  %2738 = vmatpush.msra.mxu0 %v2737
  %v2739 = vand.u32 %v134, 4294901760
  %v2740 = vsub.f32 %v134, %v2739
  %2741 = vmatpush.msra.mxu0 %v2740
  %v2742 = vand.u32 %v133, 4294901760
  %v2743 = vsub.f32 %v133, %v2742
  %2744 = vmatpush.msra.mxu0 %v2743
  %v2745 = vand.u32 %v132, 4294901760
  %v2746 = vsub.f32 %v132, %v2745
  %2747 = vmatpush.msra.mxu0 %v2746
  %v2748 = vand.u32 %v131, 4294901760
  %v2749 = vsub.f32 %v131, %v2748
  %2750 = vmatpush.msra.mxu0 %v2749
  %v2751 = vand.u32 %v130, 4294901760
  %v2752 = vsub.f32 %v130, %v2751
  %2753 = vmatpush.msra.mxu0 %v2752
  %v2754 = vand.u32 %v168, 4294901760
  %v2755 = vsub.f32 %v168, %v2754
  %2756 = vmatmul.f32.gmra.mxu0 %v2755
  %v2757 = vpop.f32.mrf.mxu0
  %v2758 = vadd.f32 %v2704, %v2757
  %2759 = vdwg.mxu0
  %v2760 = vand.u32 %v145, 4294901760
  %2761 = vmatpush.msra.mxu0 %v2760
  %v2762 = vand.u32 %v144, 4294901760
  %2763 = vmatpush.msra.mxu0 %v2762
  %v2764 = vand.u32 %v143, 4294901760
  %2765 = vmatpush.msra.mxu0 %v2764
  %v2766 = vand.u32 %v142, 4294901760
  %2767 = vmatpush.msra.mxu0 %v2766
  %v2768 = vand.u32 %v141, 4294901760
  %2769 = vmatpush.msra.mxu0 %v2768
  %v2770 = vand.u32 %v140, 4294901760
  %2771 = vmatpush.msra.mxu0 %v2770
  %v2772 = vand.u32 %v139, 4294901760
  %2773 = vmatpush.msra.mxu0 %v2772
  %v2774 = vand.u32 %v138, 4294901760
  %2775 = vmatpush.msra.mxu0 %v2774
  %v2776 = vand.u32 %v137, 4294901760
  %2777 = vmatpush.msra.mxu0 %v2776
  %v2778 = vand.u32 %v136, 4294901760
  %2779 = vmatpush.msra.mxu0 %v2778
  %v2780 = vand.u32 %v135, 4294901760
  %2781 = vmatpush.msra.mxu0 %v2780
  %v2782 = vand.u32 %v134, 4294901760
  %2783 = vmatpush.msra.mxu0 %v2782
  %v2784 = vand.u32 %v133, 4294901760
  %2785 = vmatpush.msra.mxu0 %v2784
  %v2786 = vand.u32 %v132, 4294901760
  %2787 = vmatpush.msra.mxu0 %v2786
  %v2788 = vand.u32 %v131, 4294901760
  %2789 = vmatpush.msra.mxu0 %v2788
  %v2790 = vand.u32 %v130, 4294901760
  %2791 = vmatpush.msra.mxu0 %v2790
  %v2792 = vand.u32 %v168, 4294901760
  %v2793 = vsub.f32 %v168, %v2792
  %v2794 = vand.u32 %v2793, 4294901760
  %2795 = vmatmul.f32.gmra.mxu0 %v2794
  %v2796 = vpop.f32.mrf.mxu0
  %v2797 = vadd.f32 %v2758, %v2796
  %2798 = vdwg.mxu0
  %v2799 = vand.u32 %v145, 4294901760
  %v2800 = vsub.f32 %v145, %v2799
  %v2801 = vand.u32 %v2800, 4294901760
  %2802 = vmatpush.msra.mxu0 %v2801
  %v2803 = vand.u32 %v144, 4294901760
  %v2804 = vsub.f32 %v144, %v2803
  %v2805 = vand.u32 %v2804, 4294901760
  %2806 = vmatpush.msra.mxu0 %v2805
  %v2807 = vand.u32 %v143, 4294901760
  %v2808 = vsub.f32 %v143, %v2807
  %v2809 = vand.u32 %v2808, 4294901760
  %2810 = vmatpush.msra.mxu0 %v2809
  %v2811 = vand.u32 %v142, 4294901760
  %v2812 = vsub.f32 %v142, %v2811
  %v2813 = vand.u32 %v2812, 4294901760
  %2814 = vmatpush.msra.mxu0 %v2813
  %v2815 = vand.u32 %v141, 4294901760
  %v2816 = vsub.f32 %v141, %v2815
  %v2817 = vand.u32 %v2816, 4294901760
  %2818 = vmatpush.msra.mxu0 %v2817
  %v2819 = vand.u32 %v140, 4294901760
  %v2820 = vsub.f32 %v140, %v2819
  %v2821 = vand.u32 %v2820, 4294901760
  %2822 = vmatpush.msra.mxu0 %v2821
  %v2823 = vand.u32 %v139, 4294901760
  %v2824 = vsub.f32 %v139, %v2823
  %v2825 = vand.u32 %v2824, 4294901760
  %2826 = vmatpush.msra.mxu0 %v2825
  %v2827 = vand.u32 %v138, 4294901760
  %v2828 = vsub.f32 %v138, %v2827
  %v2829 = vand.u32 %v2828, 4294901760
  %2830 = vmatpush.msra.mxu0 %v2829
  %v2831 = vand.u32 %v137, 4294901760
  %v2832 = vsub.f32 %v137, %v2831
  %v2833 = vand.u32 %v2832, 4294901760
  %2834 = vmatpush.msra.mxu0 %v2833
  %v2835 = vand.u32 %v136, 4294901760
  %v2836 = vsub.f32 %v136, %v2835
  %v2837 = vand.u32 %v2836, 4294901760
  %2838 = vmatpush.msra.mxu0 %v2837
  %v2839 = vand.u32 %v135, 4294901760
  %v2840 = vsub.f32 %v135, %v2839
  %v2841 = vand.u32 %v2840, 4294901760
  %2842 = vmatpush.msra.mxu0 %v2841
  %v2843 = vand.u32 %v134, 4294901760
  %v2844 = vsub.f32 %v134, %v2843
  %v2845 = vand.u32 %v2844, 4294901760
  %2846 = vmatpush.msra.mxu0 %v2845
  %v2847 = vand.u32 %v133, 4294901760
  %v2848 = vsub.f32 %v133, %v2847
  %v2849 = vand.u32 %v2848, 4294901760
  %2850 = vmatpush.msra.mxu0 %v2849
  %v2851 = vand.u32 %v132, 4294901760
  %v2852 = vsub.f32 %v132, %v2851
  %v2853 = vand.u32 %v2852, 4294901760
  %2854 = vmatpush.msra.mxu0 %v2853
  %v2855 = vand.u32 %v131, 4294901760
  %v2856 = vsub.f32 %v131, %v2855
  %v2857 = vand.u32 %v2856, 4294901760
  %2858 = vmatpush.msra.mxu0 %v2857
  %v2859 = vand.u32 %v130, 4294901760
  %v2860 = vsub.f32 %v130, %v2859
  %v2861 = vand.u32 %v2860, 4294901760
  %2862 = vmatpush.msra.mxu0 %v2861
  %v2863 = vand.u32 %v168, 4294901760
  %2864 = vmatmul.f32.gmra.mxu0 %v2863
  %v2865 = vpop.f32.mrf.mxu0
  %v2866 = vadd.f32 %v2797, %v2865
  %2867 = vdwg.mxu0
  %v2868 = vand.u32 %v145, 4294901760
  %2869 = vmatpush.msra.mxu0 %v2868
  %v2870 = vand.u32 %v144, 4294901760
  %2871 = vmatpush.msra.mxu0 %v2870
  %v2872 = vand.u32 %v143, 4294901760
  %2873 = vmatpush.msra.mxu0 %v2872
  %v2874 = vand.u32 %v142, 4294901760
  %2875 = vmatpush.msra.mxu0 %v2874
  %v2876 = vand.u32 %v141, 4294901760
  %2877 = vmatpush.msra.mxu0 %v2876
  %v2878 = vand.u32 %v140, 4294901760
  %2879 = vmatpush.msra.mxu0 %v2878
  %v2880 = vand.u32 %v139, 4294901760
  %2881 = vmatpush.msra.mxu0 %v2880
  %v2882 = vand.u32 %v138, 4294901760
  %2883 = vmatpush.msra.mxu0 %v2882
  %v2884 = vand.u32 %v137, 4294901760
  %2885 = vmatpush.msra.mxu0 %v2884
  %v2886 = vand.u32 %v136, 4294901760
  %2887 = vmatpush.msra.mxu0 %v2886
  %v2888 = vand.u32 %v135, 4294901760
  %2889 = vmatpush.msra.mxu0 %v2888
  %v2890 = vand.u32 %v134, 4294901760
  %2891 = vmatpush.msra.mxu0 %v2890
  %v2892 = vand.u32 %v133, 4294901760
  %2893 = vmatpush.msra.mxu0 %v2892
  %v2894 = vand.u32 %v132, 4294901760
  %2895 = vmatpush.msra.mxu0 %v2894
  %v2896 = vand.u32 %v131, 4294901760
  %2897 = vmatpush.msra.mxu0 %v2896
  %v2898 = vand.u32 %v130, 4294901760
  %2899 = vmatpush.msra.mxu0 %v2898
  %v2900 = vand.u32 %v168, 4294901760
  %2901 = vmatmul.f32.gmra.mxu0 %v2900
  %v2902 = vpop.f32.mrf.mxu0
  %v2903 = vadd.f32 %v2866, %v2902
  %2904 = vdwg.mxu0
  %2905 = vst [vmem:[%s3] sm:$0xf] %v2903
  // Predicated region
  $region14: #{linear_encoder.1} parent=0 // pred_check
    _
  $region15: #{linear_encoder.1} parent=0 // pred_check_branch
    %2907 = sbr.rel (0) target = $region17
  $region16: #{linear_encoder.1} parent=0 // pred_region
    _
  $region17: #{linear_encoder.1} parent=0 // pred_fallthru
    _
  // Predicated region
  $region18: #{linear_encoder.1} parent=0 // pred_check
    _
  $region19: #{linear_encoder.1} parent=0 // pred_check_branch
    %2909 = sbr.rel (0) target = $region21
  $region20: #{linear_encoder.1} parent=0 // pred_region
    _
  $region21: #{linear_encoder.1} parent=0 // pred_fallthru
    _

</llo_original>
